<compile_context>
chip_gen: v5e
topology: v5e:2x2
jax: 0.10.0
libtpu: 0.0.40
codegen_flags: <defaults>
</compile_context>

<pallas_src>
import functools

import jax
import jax.numpy as jnp
from jax.experimental import pallas as pl
from jax.experimental.pallas import tpu as pltpu

_LANE_CHOICES = (4096, 2048, 1024, 512, 256, 128)  # lane-dense last dims
_MIN_LANES = 128
_TARGET_TILE_ELEMS = 512 * 1024                    # ~2 MiB per f32 tile


def _cosine_cutoff_kernel(x_ref, o_ref, *, cut_off):
    # 0.5*(1 + cos(pi*x/c)) * (x < c)  ==  cos(pi*x/(2c))**2  gated by (x < c)
    x = x_ref[...]
    c = jnp.cos(x * (0.5 * jnp.pi / cut_off))
    val = c * c
    o_ref[...] = jnp.where(x < cut_off, val, jnp.zeros_like(val))


def _pick_block_rows(rows, lanes):
    """8-aligned row tile: <= ~2 MiB (f32); >=4 even grid steps for large inputs."""
    cap = max(8, (_TARGET_TILE_ELEMS // lanes) // 8 * 8)
    if rows <= cap:
        return rows  # single block == full dim, always a valid BlockSpec
    n_blocks = max(4, pl.cdiv(rows, cap))  # megacore: at least 4 steps, even split
    return max(8, min(cap, pl.cdiv(pl.cdiv(rows, n_blocks), 8) * 8))


def cosine_cutoff(x, cut_off):
    """Elementwise CosineCutoff(cut_off)(x) for x of any shape/rank."""
    orig_shape = x.shape
    n = x.size
    if n == 0:
        return x

    # Lane-dense 2-D view. Prefer a zero-copy reshape (no pad, no post-slice);
    # only tensors whose element count is not a multiple of 128 pad the final
    # partial vreg and slice it back off afterwards.
    lanes = next((l for l in _LANE_CHOICES if n >= l and n % l == 0), None)
    padded = lanes is None
    if padded:
        lanes = _MIN_LANES
        n_pad = pl.cdiv(n, lanes) * lanes
        x2d = jnp.pad(x.reshape(-1), (0, n_pad - n)).reshape(-1, lanes)
    else:
        x2d = x.reshape(-1, lanes)

    rows = x2d.shape[0]
    block_rows = _pick_block_rows(rows, lanes)
    grid = (pl.cdiv(rows, block_rows),)  # ragged last block is masked by Pallas

    out2d = pl.pallas_call(
        functools.partial(_cosine_cutoff_kernel, cut_off=float(cut_off)),
        out_shape=jax.ShapeDtypeStruct(x2d.shape, x.dtype),
        grid=grid,
        in_specs=[pl.BlockSpec((block_rows, lanes), lambda i: (i, 0))],
        out_specs=pl.BlockSpec((block_rows, lanes), lambda i: (i, 0)),
        compiler_params=pltpu.CompilerParams(
            dimension_semantics=("parallel",)),
    )(x2d)

    if padded:
        return out2d.reshape(-1)[:n].reshape(orig_shape)
    return out2d.reshape(orig_shape)


def _reference(x, cut_off):
    return 0.5 * (1.0 + jnp.cos(x * jnp.pi / cut_off)) * (x < cut_off).astype(x.dtype)


if __name__ == "__main__":
    key = jax.random.PRNGKey(0)
    k1, k2, k3 = jax.random.split(key, 3)
    cut_off = 5.0
    fn = jax.jit(functools.partial(cosine_cutoff, cut_off=cut_off))

    # Feature-like tensor: element count divisible by 128 -> zero-copy path.
    x = 2.0 * cut_off * jax.random.uniform(k1, (64, 256), dtype=jnp.float32)
    # PaiNN edge-distance tensor [E, 1]: tiny, padded-tail path, single block.
    d = 2.0 * cut_off * jax.random.uniform(k2, (20, 1), dtype=jnp.float32)
    # Odd-shaped tensor: padded-tail path with several rows.
    w = 2.0 * cut_off * jax.random.uniform(k3, (257, 3), dtype=jnp.float32)

    outs = [fn(x), fn(d), fn(w)]
    jax.block_until_ready(outs)

    for inp, out in zip((x, d, w), outs):
        assert out.shape == inp.shape and out.dtype == inp.dtype
        assert jnp.allclose(out, _reference(inp, cut_off), atol=1e-6, rtol=1e-6)
    print("KERNEL_OK")
</pallas_src>

<mosaic_0001>
module attributes {stable_mosaic.version = 11 : i64} {
  func.func @_cosine_cutoff_kernel(%arg0: i32, %arg1: memref<4x4096xf32, #tpu.memory_space<vmem>>, %arg2: memref<4x4096xf32, #tpu.memory_space<vmem>>) attributes {dimension_semantics = [#tpu.dimension_semantics<parallel>], iteration_bounds = array<i64: 1>, scalar_prefetch = 0 : i64, scratch_operands = 0 : i64, tpu.core_type = #tpu.core_type<tc>, window_params = [{transform_indices = @transform_0, window_bounds = array<i64: 4, 4096>}, {transform_indices = @transform_1, window_bounds = array<i64: 4, 4096>}]} {
    %c0 = arith.constant 0 : index
    %c0_0 = arith.constant 0 : index
    %0 = vector.load %arg1[%c0, %c0_0] : memref<4x4096xf32, #tpu.memory_space<vmem>>, vector<4x4096xf32>
    %cst = arith.constant 0.314159274 : f32
    %1 = vector.broadcast %cst : f32 to vector<4x4096xf32>
    %2 = arith.mulf %0, %1 : vector<4x4096xf32>
    %3 = math.cos %2 : vector<4x4096xf32>
    %4 = arith.mulf %3, %3 : vector<4x4096xf32>
    %cst_1 = arith.constant 5.000000e+00 : f32
    %5 = vector.broadcast %cst_1 : f32 to vector<4x4096xf32>
    %6 = arith.cmpf olt, %0, %5 : vector<4x4096xf32>
    %cst_2 = arith.constant 0.000000e+00 : f32
    %7 = vector.broadcast %cst_2 : f32 to vector<4x4096xf32>
    %8 = arith.select %6, %4, %7 : vector<4x4096xi1>, vector<4x4096xf32>
    %c0_3 = arith.constant 0 : index
    %c0_4 = arith.constant 0 : index
    %9 = vector.load %arg2[%c0_3, %c0_4] : memref<4x4096xf32, #tpu.memory_space<vmem>>, vector<4x4096xf32>
    tpu.vector_store %arg2[%c0_3, %c0_4], %8 {strides = array<i32>} : memref<4x4096xf32, #tpu.memory_space<vmem>>, vector<4x4096xf32>,
    return
  }
  func.func @transform_0(%arg0: i32) -> (i32, i32) {
    %c0_i32 = arith.constant 0 : i32
    %c0_i32_0 = arith.constant 0 : i32
    return %arg0, %c0_i32 : i32, i32
  }
  func.func @transform_1(%arg0: i32) -> (i32, i32) {
    %c0_i32 = arith.constant 0 : i32
    %c0_i32_0 = arith.constant 0 : i32
    return %arg0, %c0_i32 : i32, i32
  }
}

</mosaic_0001>

<llo_original>
// kernel: cosine_cutoff.1
$region0: #{cosine_cutoff.1}
  #allocation0 [shape = 'u32[]', space=smem, size = 0x4, offset = 0x4, fixed_abs, tag = 'smem constant byte address 0x4 - core index']
  #allocation1 [shape = 'u32[72,128]{1,0:T(1,128)}', space=vmem, size = 0x9000, scoped, tag = 'internal scratch']
  %s0 = inlined_call_operand.vmem [shape: f32[4,4096], index: 0, kind: input, shape index: {}]
  %s1 = inlined_call_operand.vmem [shape: f32[4,4096], index: 1, kind: output, shape index: {}]
  %s2 = sld [smem:[#allocation0]]
  $region14: #{cosine_cutoff.1} parent=0
    _
  %s4 = ssub.s32 1, %s2
  %s5 = scalar_select 0, %s4, %s2
  // Predicated region
  $region2: #{cosine_cutoff.1} parent=0 // pred_check
    _
  $region3: #{cosine_cutoff.1} parent=0 // pred_check_branch
    %7 = sbr.rel (0) target = $region5
  $region4: #{cosine_cutoff.1} parent=0 // pred_region
    _
  $region5: #{cosine_cutoff.1} parent=0 // pred_fallthru
    _
  %v8 = vld [vmem:[%s0] sm:$0xff]
  %v9 = vld [vmem:[%s0 + $0x8] sm:$0xff]
  %v10 = vld [vmem:[%s0 + $0x10] sm:$0xff]
  %v11 = vld [vmem:[%s0 + $0x18] sm:$0xff]
  %v12 = vld [vmem:[%s0 + $0x20] sm:$0xff]
  %v13 = vld [vmem:[%s0 + $0x28] sm:$0xff]
  %v14 = vld [vmem:[%s0 + $0x30] sm:$0xff]
  %v15 = vld [vmem:[%s0 + $0x38] sm:$0xff]
  %v16 = vld [vmem:[%s0 + $0x40] sm:$0xff]
  %v17 = vld [vmem:[%s0 + $0x48] sm:$0xff]
  %v18 = vld [vmem:[%s0 + $0x50] sm:$0xff]
  %v19 = vld [vmem:[%s0 + $0x58] sm:$0xff]
  %v20 = vld [vmem:[%s0 + $0x60] sm:$0xff]
  %v21 = vld [vmem:[%s0 + $0x68] sm:$0xff]
  %v22 = vld [vmem:[%s0 + $0x70] sm:$0xff]
  %v23 = vld [vmem:[%s0 + $0x78] sm:$0xff]
  %v24 = vmul.f32 %v8, 0.31415927
  %v25 = vmul.f32 %v9, 0.31415927
  %v26 = vmul.f32 %v10, 0.31415927
  %v27 = vmul.f32 %v11, 0.31415927
  %v28 = vmul.f32 %v12, 0.31415927
  %v29 = vmul.f32 %v13, 0.31415927
  %v30 = vmul.f32 %v14, 0.31415927
  %v31 = vmul.f32 %v15, 0.31415927
  %v32 = vmul.f32 %v16, 0.31415927
  %v33 = vmul.f32 %v17, 0.31415927
  %v34 = vmul.f32 %v18, 0.31415927
  %v35 = vmul.f32 %v19, 0.31415927
  %v36 = vmul.f32 %v20, 0.31415927
  %v37 = vmul.f32 %v21, 0.31415927
  %v38 = vmul.f32 %v22, 0.31415927
  %v39 = vmul.f32 %v23, 0.31415927
  %v40 = vand.u32 2147483647, %v24
  %vm41 = vcmp.le.f32.partialorder %v40, 0.7853982
  %vm42 = vcmp.lt.s32.totalorder %v24, 0
  %v43 = vand.u32 %v24, 2139095040
  %v44 = vshrl.u32 %v43, 23
  %v45 = vsub.s32 %v44, 127
  %v46 = vand.u32 2147483647, %v24
  %v47 = vand.u32 %v46, 8388607
  %v48 = vor.u32 %v47, 8388608
  %v49 = vsub.s32 0, %v48
  %v50 = vadd.s32 %v45, 1
  %vm51 = vcmp.gt.s32.totalorder %v50, 0
  %v52 = vsel %vm51, %v50, 0
  %v53 = vshrl.u32 %v52, 5
  %v54 = vand.u32 %v52, 31
  %v55 = vsub.s32 32, %v54
  %v56 = vshrl.u32 683565275, %v55
  %v57 = vshll.u32 683565275, %v54
  %v58 = vshrl.u32 2475754826, %v55
  %v59 = vor.u32 %v57, %v58
  %v60 = vshll.u32 2475754826, %v54
  %v61 = vshrl.u32 2131351028, %v55
  %v62 = vor.u32 %v60, %v61
  %v63 = vshll.u32 2131351028, %v54
  %v64 = vshrl.u32 2102212464, %v55
  %v65 = vor.u32 %v63, %v64
  %v66 = vshll.u32 2102212464, %v54
  %v67 = vshrl.u32 920167782, %v55
  %v68 = vor.u32 %v66, %v67
  %v69 = vshll.u32 920167782, %v54
  %v70 = vshrl.u32 1326507024, %v55
  %v71 = vor.u32 %v69, %v70
  %vm72 = vcmp.lt.s32.totalorder %v53, 1
  %vm73 = vcmp.lt.s32.totalorder %v53, 2
  %vm74 = vcmp.lt.s32.totalorder %v53, 3
  %vm75 = vcmp.lt.s32.totalorder %v53, 4
  %v76 = vsel %vm72, %v56, %v59
  %v77 = vsel %vm75, %v65, 2102212464
  %v78 = vsel %vm74, %v62, %v77
  %v79 = vsel %vm73, %v76, %v78
  %v80 = vsel %vm72, %v59, %v62
  %v81 = vsel %vm75, %v68, 920167782
  %v82 = vsel %vm74, %v65, %v81
  %v83 = vsel %vm73, %v80, %v82
  %v84 = vsel %vm72, %v62, %v65
  %v85 = vsel %vm75, %v71, 1326507024
  %v86 = vsel %vm74, %v68, %v85
  %v87 = vsel %vm73, %v84, %v86
  %v88 = vshll.u32 %v48, 8
  %v89 = vand.u32 %v88, 65535
  %v90 = vshrl.u32 %v88, 16
  %v91 = vand.u32 %v87, 65535
  %v92 = vshrl.u32 %v87, 16
  %v93 = vmul.u32 %v89, %v91
  %v94 = vmul.u32 %v89, %v92
  %v95 = vmul.u32 %v90, %v91
  %v96 = vmul.u32 %v90, %v92
  %v97 = vshll.u32 %v94, 16
  %v98 = vshrl.u32 %v94, 16
  %v99 = vshll.u32 %v95, 16
  %v100 = vshrl.u32 %v95, 16
  %vm101 = vc.u32 %v93, %v97
  %v102 = vsel %vm101, 1, 0
  %v103 = vadd.s32 %v93, %v97
  %v104 = vadd.s32 %v96, %v102
  %vm105 = vc.u32 %v103, %v99
  %v106 = vsel %vm105, 1, 0
  %v107 = vadd.s32 %v103, %v99
  %v108 = vadd.s32 %v104, %v106
  %v109 = vadd.s32 %v108, %v98
  %v110 = vadd.s32 %v109, %v100
  %v111 = vand.u32 %v88, 65535
  %v112 = vshrl.u32 %v88, 16
  %v113 = vand.u32 %v83, 65535
  %v114 = vshrl.u32 %v83, 16
  %v115 = vmul.u32 %v111, %v113
  %v116 = vmul.u32 %v111, %v114
  %v117 = vmul.u32 %v112, %v113
  %v118 = vmul.u32 %v112, %v114
  %v119 = vshll.u32 %v116, 16
  %v120 = vshrl.u32 %v116, 16
  %v121 = vshll.u32 %v117, 16
  %v122 = vshrl.u32 %v117, 16
  %vm123 = vc.u32 %v115, %v119
  %v124 = vsel %vm123, 1, 0
  %v125 = vadd.s32 %v115, %v119
  %v126 = vadd.s32 %v118, %v124
  %vm127 = vc.u32 %v125, %v121
  %v128 = vsel %vm127, 1, 0
  %v129 = vadd.s32 %v125, %v121
  %v130 = vadd.s32 %v126, %v128
  %v131 = vadd.s32 %v130, %v120
  %v132 = vadd.s32 %v131, %v122
  %v133 = vmul.u32 %v88, %v79
  %v134 = vadd.s32 %v110, %v129
  %vm135 = vc.u32 %v110, %v129
  %v136 = vadd.s32 %v132, 1
  %v137 = vsel %vm135, %v136, %v132
  %v138 = vadd.s32 %v133, %v137
  %v139 = vadd.s32 %v138, 536870912
  %v140 = vshrl.u32 %v139, 30
  %v141 = vshll.u32 %v140, 30
  %v142 = vsub.s32 %v138, %v141
  %vm143 = vcmp.lt.s32.totalorder %v142, 0
  %v144 = vsub.s32 0, %v142
  %v145 = vsel %vm143, %v144, %v142
  %v146 = vclz %v145
  %v147 = vsub.s32 %v146, 2
  %vm148 = vcmp.gt.s32.totalorder 0, %v147
  %v149 = vsel %vm148, 0, %v147
  %v150 = vsub.s32 32, %v149
  %v151 = vshll.u32 %v142, %v149
  %v152 = vshrl.u32 %v134, %v150
  %v153 = vor.u32 %v151, %v152
  %v154 = vsub.s32 4294967266, %v149
  %v155 = vadd.s32 %v154, 127
  %v156 = vshll.u32 %v155, 23
  %v157 = vor.u32 4788187, %v156
  %v158 = vand.u32 2147483647, %v157
  %v160 = vcvt.s32.f32 %v153
  %v161 = vmul.f32 %v160, %v158
  %v162 = vxor.u32 %v161, 2147483648
  %v163 = vsel %vm42, %v162, %v161
  %v164 = vsub.s32 4, %v140
  %v165 = vsel %vm42, %v164, %v140
  %v166 = vsel %vm41, %v24, %v163
  %v167 = vsel %vm41, 0, %v165
  %v168 = vmul.f32 %v166, %v166
  %v169 = vmul.f32 %v168, -0.001358992
  %v170 = vadd.f32 %v169, 0.041655596
  %v171 = vmul.f32 %v168, %v170
  %v172 = vadd.f32 %v171, -0.4999988
  %v173 = vmul.f32 %v168, %v172
  %v174 = vadd.f32 1.0, %v173
  %v175 = vmul.f32 %v166, %v166
  %v176 = vmul.f32 %v175, -0.00019511016
  %v177 = vadd.f32 %v176, 0.008332121
  %v178 = vmul.f32 %v175, %v177
  %v179 = vadd.f32 %v178, -0.16666654
  %v180 = vmul.f32 %v175, %v179
  %v181 = vadd.f32 %v180, 1.0
  %v182 = vmul.f32 %v181, %v166
  %vm183 = vweird.f32 %v24
  %v184 = vand.u32 %v167, 3
  %vm185 = vcmp.lt.s32.totalorder %v184, 2
  %vm186 = vcmp.eq.s32.totalorder %v184, 0
  %v187 = vxor.u32 %v182, 2147483648
  %v188 = vsel %vm186, %v174, %v187
  %vm189 = vcmp.eq.s32.totalorder %v184, 2
  %v190 = vxor.u32 %v174, 2147483648
  %v191 = vsel %vm189, %v190, %v182
  %v192 = vsel %vm185, %v188, %v191
  %v193 = vsel %vm183, nan, %v192
  %v194 = vand.u32 2147483647, %v25
  %vm195 = vcmp.le.f32.partialorder %v194, 0.7853982
  %vm196 = vcmp.lt.s32.totalorder %v25, 0
  %v197 = vand.u32 %v25, 2139095040
  %v198 = vshrl.u32 %v197, 23
  %v199 = vsub.s32 %v198, 127
  %v200 = vand.u32 2147483647, %v25
  %v201 = vand.u32 %v200, 8388607
  %v202 = vor.u32 %v201, 8388608
  %v203 = vsub.s32 0, %v202
  %v204 = vadd.s32 %v199, 1
  %vm205 = vcmp.gt.s32.totalorder %v204, 0
  %v206 = vsel %vm205, %v204, 0
  %v207 = vshrl.u32 %v206, 5
  %v208 = vand.u32 %v206, 31
  %v209 = vsub.s32 32, %v208
  %v210 = vshrl.u32 683565275, %v209
  %v211 = vshll.u32 683565275, %v208
  %v212 = vshrl.u32 2475754826, %v209
  %v213 = vor.u32 %v211, %v212
  %v214 = vshll.u32 2475754826, %v208
  %v215 = vshrl.u32 2131351028, %v209
  %v216 = vor.u32 %v214, %v215
  %v217 = vshll.u32 2131351028, %v208
  %v218 = vshrl.u32 2102212464, %v209
  %v219 = vor.u32 %v217, %v218
  %v220 = vshll.u32 2102212464, %v208
  %v221 = vshrl.u32 920167782, %v209
  %v222 = vor.u32 %v220, %v221
  %v223 = vshll.u32 920167782, %v208
  %v224 = vshrl.u32 1326507024, %v209
  %v225 = vor.u32 %v223, %v224
  %vm226 = vcmp.lt.s32.totalorder %v207, 1
  %vm227 = vcmp.lt.s32.totalorder %v207, 2
  %vm228 = vcmp.lt.s32.totalorder %v207, 3
  %vm229 = vcmp.lt.s32.totalorder %v207, 4
  %v230 = vsel %vm226, %v210, %v213
  %v231 = vsel %vm229, %v219, 2102212464
  %v232 = vsel %vm228, %v216, %v231
  %v233 = vsel %vm227, %v230, %v232
  %v234 = vsel %vm226, %v213, %v216
  %v235 = vsel %vm229, %v222, 920167782
  %v236 = vsel %vm228, %v219, %v235
  %v237 = vsel %vm227, %v234, %v236
  %v238 = vsel %vm226, %v216, %v219
  %v239 = vsel %vm229, %v225, 1326507024
  %v240 = vsel %vm228, %v222, %v239
  %v241 = vsel %vm227, %v238, %v240
  %v242 = vshll.u32 %v202, 8
  %v243 = vand.u32 %v242, 65535
  %v244 = vshrl.u32 %v242, 16
  %v245 = vand.u32 %v241, 65535
  %v246 = vshrl.u32 %v241, 16
  %v247 = vmul.u32 %v243, %v245
  %v248 = vmul.u32 %v243, %v246
  %v249 = vmul.u32 %v244, %v245
  %v250 = vmul.u32 %v244, %v246
  %v251 = vshll.u32 %v248, 16
  %v252 = vshrl.u32 %v248, 16
  %v253 = vshll.u32 %v249, 16
  %v254 = vshrl.u32 %v249, 16
  %vm255 = vc.u32 %v247, %v251
  %v256 = vsel %vm255, 1, 0
  %v257 = vadd.s32 %v247, %v251
  %v258 = vadd.s32 %v250, %v256
  %vm259 = vc.u32 %v257, %v253
  %v260 = vsel %vm259, 1, 0
  %v261 = vadd.s32 %v257, %v253
  %v262 = vadd.s32 %v258, %v260
  %v263 = vadd.s32 %v262, %v252
  %v264 = vadd.s32 %v263, %v254
  %v265 = vand.u32 %v242, 65535
  %v266 = vshrl.u32 %v242, 16
  %v267 = vand.u32 %v237, 65535
  %v268 = vshrl.u32 %v237, 16
  %v269 = vmul.u32 %v265, %v267
  %v270 = vmul.u32 %v265, %v268
  %v271 = vmul.u32 %v266, %v267
  %v272 = vmul.u32 %v266, %v268
  %v273 = vshll.u32 %v270, 16
  %v274 = vshrl.u32 %v270, 16
  %v275 = vshll.u32 %v271, 16
  %v276 = vshrl.u32 %v271, 16
  %vm277 = vc.u32 %v269, %v273
  %v278 = vsel %vm277, 1, 0
  %v279 = vadd.s32 %v269, %v273
  %v280 = vadd.s32 %v272, %v278
  %vm281 = vc.u32 %v279, %v275
  %v282 = vsel %vm281, 1, 0
  %v283 = vadd.s32 %v279, %v275
  %v284 = vadd.s32 %v280, %v282
  %v285 = vadd.s32 %v284, %v274
  %v286 = vadd.s32 %v285, %v276
  %v287 = vmul.u32 %v242, %v233
  %v288 = vadd.s32 %v264, %v283
  %vm289 = vc.u32 %v264, %v283
  %v290 = vadd.s32 %v286, 1
  %v291 = vsel %vm289, %v290, %v286
  %v292 = vadd.s32 %v287, %v291
  %v293 = vadd.s32 %v292, 536870912
  %v294 = vshrl.u32 %v293, 30
  %v295 = vshll.u32 %v294, 30
  %v296 = vsub.s32 %v292, %v295
  %vm297 = vcmp.lt.s32.totalorder %v296, 0
  %v298 = vsub.s32 0, %v296
  %v299 = vsel %vm297, %v298, %v296
  %v300 = vclz %v299
  %v301 = vsub.s32 %v300, 2
  %vm302 = vcmp.gt.s32.totalorder 0, %v301
  %v303 = vsel %vm302, 0, %v301
  %v304 = vsub.s32 32, %v303
  %v305 = vshll.u32 %v296, %v303
  %v306 = vshrl.u32 %v288, %v304
  %v307 = vor.u32 %v305, %v306
  %v308 = vsub.s32 4294967266, %v303
  %v309 = vadd.s32 %v308, 127
  %v310 = vshll.u32 %v309, 23
  %v311 = vor.u32 4788187, %v310
  %v312 = vand.u32 2147483647, %v311
  %v314 = vcvt.s32.f32 %v307
  %v315 = vmul.f32 %v314, %v312
  %v316 = vxor.u32 %v315, 2147483648
  %v317 = vsel %vm196, %v316, %v315
  %v318 = vsub.s32 4, %v294
  %v319 = vsel %vm196, %v318, %v294
  %v320 = vsel %vm195, %v25, %v317
  %v321 = vsel %vm195, 0, %v319
  %v322 = vmul.f32 %v320, %v320
  %v323 = vmul.f32 %v322, -0.001358992
  %v324 = vadd.f32 %v323, 0.041655596
  %v325 = vmul.f32 %v322, %v324
  %v326 = vadd.f32 %v325, -0.4999988
  %v327 = vmul.f32 %v322, %v326
  %v328 = vadd.f32 1.0, %v327
  %v329 = vmul.f32 %v320, %v320
  %v330 = vmul.f32 %v329, -0.00019511016
  %v331 = vadd.f32 %v330, 0.008332121
  %v332 = vmul.f32 %v329, %v331
  %v333 = vadd.f32 %v332, -0.16666654
  %v334 = vmul.f32 %v329, %v333
  %v335 = vadd.f32 %v334, 1.0
  %v336 = vmul.f32 %v335, %v320
  %vm337 = vweird.f32 %v25
  %v338 = vand.u32 %v321, 3
  %vm339 = vcmp.lt.s32.totalorder %v338, 2
  %vm340 = vcmp.eq.s32.totalorder %v338, 0
  %v341 = vxor.u32 %v336, 2147483648
  %v342 = vsel %vm340, %v328, %v341
  %vm343 = vcmp.eq.s32.totalorder %v338, 2
  %v344 = vxor.u32 %v328, 2147483648
  %v345 = vsel %vm343, %v344, %v336
  %v346 = vsel %vm339, %v342, %v345
  %v347 = vsel %vm337, nan, %v346
  %v348 = vand.u32 2147483647, %v26
  %vm349 = vcmp.le.f32.partialorder %v348, 0.7853982
  %vm350 = vcmp.lt.s32.totalorder %v26, 0
  %v351 = vand.u32 %v26, 2139095040
  %v352 = vshrl.u32 %v351, 23
  %v353 = vsub.s32 %v352, 127
  %v354 = vand.u32 2147483647, %v26
  %v355 = vand.u32 %v354, 8388607
  %v356 = vor.u32 %v355, 8388608
  %v357 = vsub.s32 0, %v356
  %v358 = vadd.s32 %v353, 1
  %vm359 = vcmp.gt.s32.totalorder %v358, 0
  %v360 = vsel %vm359, %v358, 0
  %v361 = vshrl.u32 %v360, 5
  %v362 = vand.u32 %v360, 31
  %v363 = vsub.s32 32, %v362
  %v364 = vshrl.u32 683565275, %v363
  %v365 = vshll.u32 683565275, %v362
  %v366 = vshrl.u32 2475754826, %v363
  %v367 = vor.u32 %v365, %v366
  %v368 = vshll.u32 2475754826, %v362
  %v369 = vshrl.u32 2131351028, %v363
  %v370 = vor.u32 %v368, %v369
  %v371 = vshll.u32 2131351028, %v362
  %v372 = vshrl.u32 2102212464, %v363
  %v373 = vor.u32 %v371, %v372
  %v374 = vshll.u32 2102212464, %v362
  %v375 = vshrl.u32 920167782, %v363
  %v376 = vor.u32 %v374, %v375
  %v377 = vshll.u32 920167782, %v362
  %v378 = vshrl.u32 1326507024, %v363
  %v379 = vor.u32 %v377, %v378
  %vm380 = vcmp.lt.s32.totalorder %v361, 1
  %vm381 = vcmp.lt.s32.totalorder %v361, 2
  %vm382 = vcmp.lt.s32.totalorder %v361, 3
  %vm383 = vcmp.lt.s32.totalorder %v361, 4
  %v384 = vsel %vm380, %v364, %v367
  %v385 = vsel %vm383, %v373, 2102212464
  %v386 = vsel %vm382, %v370, %v385
  %v387 = vsel %vm381, %v384, %v386
  %v388 = vsel %vm380, %v367, %v370
  %v389 = vsel %vm383, %v376, 920167782
  %v390 = vsel %vm382, %v373, %v389
  %v391 = vsel %vm381, %v388, %v390
  %v392 = vsel %vm380, %v370, %v373
  %v393 = vsel %vm383, %v379, 1326507024
  %v394 = vsel %vm382, %v376, %v393
  %v395 = vsel %vm381, %v392, %v394
  %v396 = vshll.u32 %v356, 8
  %v397 = vand.u32 %v396, 65535
  %v398 = vshrl.u32 %v396, 16
  %v399 = vand.u32 %v395, 65535
  %v400 = vshrl.u32 %v395, 16
  %v401 = vmul.u32 %v397, %v399
  %v402 = vmul.u32 %v397, %v400
  %v403 = vmul.u32 %v398, %v399
  %v404 = vmul.u32 %v398, %v400
  %v405 = vshll.u32 %v402, 16
  %v406 = vshrl.u32 %v402, 16
  %v407 = vshll.u32 %v403, 16
  %v408 = vshrl.u32 %v403, 16
  %vm409 = vc.u32 %v401, %v405
  %v410 = vsel %vm409, 1, 0
  %v411 = vadd.s32 %v401, %v405
  %v412 = vadd.s32 %v404, %v410
  %vm413 = vc.u32 %v411, %v407
  %v414 = vsel %vm413, 1, 0
  %v415 = vadd.s32 %v411, %v407
  %v416 = vadd.s32 %v412, %v414
  %v417 = vadd.s32 %v416, %v406
  %v418 = vadd.s32 %v417, %v408
  %v419 = vand.u32 %v396, 65535
  %v420 = vshrl.u32 %v396, 16
  %v421 = vand.u32 %v391, 65535
  %v422 = vshrl.u32 %v391, 16
  %v423 = vmul.u32 %v419, %v421
  %v424 = vmul.u32 %v419, %v422
  %v425 = vmul.u32 %v420, %v421
  %v426 = vmul.u32 %v420, %v422
  %v427 = vshll.u32 %v424, 16
  %v428 = vshrl.u32 %v424, 16
  %v429 = vshll.u32 %v425, 16
  %v430 = vshrl.u32 %v425, 16
  %vm431 = vc.u32 %v423, %v427
  %v432 = vsel %vm431, 1, 0
  %v433 = vadd.s32 %v423, %v427
  %v434 = vadd.s32 %v426, %v432
  %vm435 = vc.u32 %v433, %v429
  %v436 = vsel %vm435, 1, 0
  %v437 = vadd.s32 %v433, %v429
  %v438 = vadd.s32 %v434, %v436
  %v439 = vadd.s32 %v438, %v428
  %v440 = vadd.s32 %v439, %v430
  %v441 = vmul.u32 %v396, %v387
  %v442 = vadd.s32 %v418, %v437
  %vm443 = vc.u32 %v418, %v437
  %v444 = vadd.s32 %v440, 1
  %v445 = vsel %vm443, %v444, %v440
  %v446 = vadd.s32 %v441, %v445
  %v447 = vadd.s32 %v446, 536870912
  %v448 = vshrl.u32 %v447, 30
  %v449 = vshll.u32 %v448, 30
  %v450 = vsub.s32 %v446, %v449
  %vm451 = vcmp.lt.s32.totalorder %v450, 0
  %v452 = vsub.s32 0, %v450
  %v453 = vsel %vm451, %v452, %v450
  %v454 = vclz %v453
  %v455 = vsub.s32 %v454, 2
  %vm456 = vcmp.gt.s32.totalorder 0, %v455
  %v457 = vsel %vm456, 0, %v455
  %v458 = vsub.s32 32, %v457
  %v459 = vshll.u32 %v450, %v457
  %v460 = vshrl.u32 %v442, %v458
  %v461 = vor.u32 %v459, %v460
  %v462 = vsub.s32 4294967266, %v457
  %v463 = vadd.s32 %v462, 127
  %v464 = vshll.u32 %v463, 23
  %v465 = vor.u32 4788187, %v464
  %v466 = vand.u32 2147483647, %v465
  %v468 = vcvt.s32.f32 %v461
  %v469 = vmul.f32 %v468, %v466
  %v470 = vxor.u32 %v469, 2147483648
  %v471 = vsel %vm350, %v470, %v469
  %v472 = vsub.s32 4, %v448
  %v473 = vsel %vm350, %v472, %v448
  %v474 = vsel %vm349, %v26, %v471
  %v475 = vsel %vm349, 0, %v473
  %v476 = vmul.f32 %v474, %v474
  %v477 = vmul.f32 %v476, -0.001358992
  %v478 = vadd.f32 %v477, 0.041655596
  %v479 = vmul.f32 %v476, %v478
  %v480 = vadd.f32 %v479, -0.4999988
  %v481 = vmul.f32 %v476, %v480
  %v482 = vadd.f32 1.0, %v481
  %v483 = vmul.f32 %v474, %v474
  %v484 = vmul.f32 %v483, -0.00019511016
  %v485 = vadd.f32 %v484, 0.008332121
  %v486 = vmul.f32 %v483, %v485
  %v487 = vadd.f32 %v486, -0.16666654
  %v488 = vmul.f32 %v483, %v487
  %v489 = vadd.f32 %v488, 1.0
  %v490 = vmul.f32 %v489, %v474
  %vm491 = vweird.f32 %v26
  %v492 = vand.u32 %v475, 3
  %vm493 = vcmp.lt.s32.totalorder %v492, 2
  %vm494 = vcmp.eq.s32.totalorder %v492, 0
  %v495 = vxor.u32 %v490, 2147483648
  %v496 = vsel %vm494, %v482, %v495
  %vm497 = vcmp.eq.s32.totalorder %v492, 2
  %v498 = vxor.u32 %v482, 2147483648
  %v499 = vsel %vm497, %v498, %v490
  %v500 = vsel %vm493, %v496, %v499
  %v501 = vsel %vm491, nan, %v500
  %v502 = vand.u32 2147483647, %v27
  %vm503 = vcmp.le.f32.partialorder %v502, 0.7853982
  %vm504 = vcmp.lt.s32.totalorder %v27, 0
  %v505 = vand.u32 %v27, 2139095040
  %v506 = vshrl.u32 %v505, 23
  %v507 = vsub.s32 %v506, 127
  %v508 = vand.u32 2147483647, %v27
  %v509 = vand.u32 %v508, 8388607
  %v510 = vor.u32 %v509, 8388608
  %v511 = vsub.s32 0, %v510
  %v512 = vadd.s32 %v507, 1
  %vm513 = vcmp.gt.s32.totalorder %v512, 0
  %v514 = vsel %vm513, %v512, 0
  %v515 = vshrl.u32 %v514, 5
  %v516 = vand.u32 %v514, 31
  %v517 = vsub.s32 32, %v516
  %v518 = vshrl.u32 683565275, %v517
  %v519 = vshll.u32 683565275, %v516
  %v520 = vshrl.u32 2475754826, %v517
  %v521 = vor.u32 %v519, %v520
  %v522 = vshll.u32 2475754826, %v516
  %v523 = vshrl.u32 2131351028, %v517
  %v524 = vor.u32 %v522, %v523
  %v525 = vshll.u32 2131351028, %v516
  %v526 = vshrl.u32 2102212464, %v517
  %v527 = vor.u32 %v525, %v526
  %v528 = vshll.u32 2102212464, %v516
  %v529 = vshrl.u32 920167782, %v517
  %v530 = vor.u32 %v528, %v529
  %v531 = vshll.u32 920167782, %v516
  %v532 = vshrl.u32 1326507024, %v517
  %v533 = vor.u32 %v531, %v532
  %vm534 = vcmp.lt.s32.totalorder %v515, 1
  %vm535 = vcmp.lt.s32.totalorder %v515, 2
  %vm536 = vcmp.lt.s32.totalorder %v515, 3
  %vm537 = vcmp.lt.s32.totalorder %v515, 4
  %v538 = vsel %vm534, %v518, %v521
  %v539 = vsel %vm537, %v527, 2102212464
  %v540 = vsel %vm536, %v524, %v539
  %v541 = vsel %vm535, %v538, %v540
  %v542 = vsel %vm534, %v521, %v524
  %v543 = vsel %vm537, %v530, 920167782
  %v544 = vsel %vm536, %v527, %v543
  %v545 = vsel %vm535, %v542, %v544
  %v546 = vsel %vm534, %v524, %v527
  %v547 = vsel %vm537, %v533, 1326507024
  %v548 = vsel %vm536, %v530, %v547
  %v549 = vsel %vm535, %v546, %v548
  %v550 = vshll.u32 %v510, 8
  %v551 = vand.u32 %v550, 65535
  %v552 = vshrl.u32 %v550, 16
  %v553 = vand.u32 %v549, 65535
  %v554 = vshrl.u32 %v549, 16
  %v555 = vmul.u32 %v551, %v553
  %v556 = vmul.u32 %v551, %v554
  %v557 = vmul.u32 %v552, %v553
  %v558 = vmul.u32 %v552, %v554
  %v559 = vshll.u32 %v556, 16
  %v560 = vshrl.u32 %v556, 16
  %v561 = vshll.u32 %v557, 16
  %v562 = vshrl.u32 %v557, 16
  %vm563 = vc.u32 %v555, %v559
  %v564 = vsel %vm563, 1, 0
  %v565 = vadd.s32 %v555, %v559
  %v566 = vadd.s32 %v558, %v564
  %vm567 = vc.u32 %v565, %v561
  %v568 = vsel %vm567, 1, 0
  %v569 = vadd.s32 %v565, %v561
  %v570 = vadd.s32 %v566, %v568
  %v571 = vadd.s32 %v570, %v560
  %v572 = vadd.s32 %v571, %v562
  %v573 = vand.u32 %v550, 65535
  %v574 = vshrl.u32 %v550, 16
  %v575 = vand.u32 %v545, 65535
  %v576 = vshrl.u32 %v545, 16
  %v577 = vmul.u32 %v573, %v575
  %v578 = vmul.u32 %v573, %v576
  %v579 = vmul.u32 %v574, %v575
  %v580 = vmul.u32 %v574, %v576
  %v581 = vshll.u32 %v578, 16
  %v582 = vshrl.u32 %v578, 16
  %v583 = vshll.u32 %v579, 16
  %v584 = vshrl.u32 %v579, 16
  %vm585 = vc.u32 %v577, %v581
  %v586 = vsel %vm585, 1, 0
  %v587 = vadd.s32 %v577, %v581
  %v588 = vadd.s32 %v580, %v586
  %vm589 = vc.u32 %v587, %v583
  %v590 = vsel %vm589, 1, 0
  %v591 = vadd.s32 %v587, %v583
  %v592 = vadd.s32 %v588, %v590
  %v593 = vadd.s32 %v592, %v582
  %v594 = vadd.s32 %v593, %v584
  %v595 = vmul.u32 %v550, %v541
  %v596 = vadd.s32 %v572, %v591
  %vm597 = vc.u32 %v572, %v591
  %v598 = vadd.s32 %v594, 1
  %v599 = vsel %vm597, %v598, %v594
  %v600 = vadd.s32 %v595, %v599
  %v601 = vadd.s32 %v600, 536870912
  %v602 = vshrl.u32 %v601, 30
  %v603 = vshll.u32 %v602, 30
  %v604 = vsub.s32 %v600, %v603
  %vm605 = vcmp.lt.s32.totalorder %v604, 0
  %v606 = vsub.s32 0, %v604
  %v607 = vsel %vm605, %v606, %v604
  %v608 = vclz %v607
  %v609 = vsub.s32 %v608, 2
  %vm610 = vcmp.gt.s32.totalorder 0, %v609
  %v611 = vsel %vm610, 0, %v609
  %v612 = vsub.s32 32, %v611
  %v613 = vshll.u32 %v604, %v611
  %v614 = vshrl.u32 %v596, %v612
  %v615 = vor.u32 %v613, %v614
  %v616 = vsub.s32 4294967266, %v611
  %v617 = vadd.s32 %v616, 127
  %v618 = vshll.u32 %v617, 23
  %v619 = vor.u32 4788187, %v618
  %v620 = vand.u32 2147483647, %v619
  %v622 = vcvt.s32.f32 %v615
  %v623 = vmul.f32 %v622, %v620
  %v624 = vxor.u32 %v623, 2147483648
  %v625 = vsel %vm504, %v624, %v623
  %v626 = vsub.s32 4, %v602
  %v627 = vsel %vm504, %v626, %v602
  %v628 = vsel %vm503, %v27, %v625
  %v629 = vsel %vm503, 0, %v627
  %v630 = vmul.f32 %v628, %v628
  %v631 = vmul.f32 %v630, -0.001358992
  %v632 = vadd.f32 %v631, 0.041655596
  %v633 = vmul.f32 %v630, %v632
  %v634 = vadd.f32 %v633, -0.4999988
  %v635 = vmul.f32 %v630, %v634
  %v636 = vadd.f32 1.0, %v635
  %v637 = vmul.f32 %v628, %v628
  %v638 = vmul.f32 %v637, -0.00019511016
  %v639 = vadd.f32 %v638, 0.008332121
  %v640 = vmul.f32 %v637, %v639
  %v641 = vadd.f32 %v640, -0.16666654
  %v642 = vmul.f32 %v637, %v641
  %v643 = vadd.f32 %v642, 1.0
  %v644 = vmul.f32 %v643, %v628
  %vm645 = vweird.f32 %v27
  %v646 = vand.u32 %v629, 3
  %vm647 = vcmp.lt.s32.totalorder %v646, 2
  %vm648 = vcmp.eq.s32.totalorder %v646, 0
  %v649 = vxor.u32 %v644, 2147483648
  %v650 = vsel %vm648, %v636, %v649
  %vm651 = vcmp.eq.s32.totalorder %v646, 2
  %v652 = vxor.u32 %v636, 2147483648
  %v653 = vsel %vm651, %v652, %v644
  %v654 = vsel %vm647, %v650, %v653
  %v655 = vsel %vm645, nan, %v654
  %v656 = vand.u32 2147483647, %v28
  %vm657 = vcmp.le.f32.partialorder %v656, 0.7853982
  %vm658 = vcmp.lt.s32.totalorder %v28, 0
  %v659 = vand.u32 %v28, 2139095040
  %v660 = vshrl.u32 %v659, 23
  %v661 = vsub.s32 %v660, 127
  %v662 = vand.u32 2147483647, %v28
  %v663 = vand.u32 %v662, 8388607
  %v664 = vor.u32 %v663, 8388608
  %v665 = vsub.s32 0, %v664
  %v666 = vadd.s32 %v661, 1
  %vm667 = vcmp.gt.s32.totalorder %v666, 0
  %v668 = vsel %vm667, %v666, 0
  %v669 = vshrl.u32 %v668, 5
  %v670 = vand.u32 %v668, 31
  %v671 = vsub.s32 32, %v670
  %v672 = vshrl.u32 683565275, %v671
  %v673 = vshll.u32 683565275, %v670
  %v674 = vshrl.u32 2475754826, %v671
  %v675 = vor.u32 %v673, %v674
  %v676 = vshll.u32 2475754826, %v670
  %v677 = vshrl.u32 2131351028, %v671
  %v678 = vor.u32 %v676, %v677
  %v679 = vshll.u32 2131351028, %v670
  %v680 = vshrl.u32 2102212464, %v671
  %v681 = vor.u32 %v679, %v680
  %v682 = vshll.u32 2102212464, %v670
  %v683 = vshrl.u32 920167782, %v671
  %v684 = vor.u32 %v682, %v683
  %v685 = vshll.u32 920167782, %v670
  %v686 = vshrl.u32 1326507024, %v671
  %v687 = vor.u32 %v685, %v686
  %vm688 = vcmp.lt.s32.totalorder %v669, 1
  %vm689 = vcmp.lt.s32.totalorder %v669, 2
  %vm690 = vcmp.lt.s32.totalorder %v669, 3
  %vm691 = vcmp.lt.s32.totalorder %v669, 4
  %v692 = vsel %vm688, %v672, %v675
  %v693 = vsel %vm691, %v681, 2102212464
  %v694 = vsel %vm690, %v678, %v693
  %v695 = vsel %vm689, %v692, %v694
  %v696 = vsel %vm688, %v675, %v678
  %v697 = vsel %vm691, %v684, 920167782
  %v698 = vsel %vm690, %v681, %v697
  %v699 = vsel %vm689, %v696, %v698
  %v700 = vsel %vm688, %v678, %v681
  %v701 = vsel %vm691, %v687, 1326507024
  %v702 = vsel %vm690, %v684, %v701
  %v703 = vsel %vm689, %v700, %v702
  %v704 = vshll.u32 %v664, 8
  %v705 = vand.u32 %v704, 65535
  %v706 = vshrl.u32 %v704, 16
  %v707 = vand.u32 %v703, 65535
  %v708 = vshrl.u32 %v703, 16
  %v709 = vmul.u32 %v705, %v707
  %v710 = vmul.u32 %v705, %v708
  %v711 = vmul.u32 %v706, %v707
  %v712 = vmul.u32 %v706, %v708
  %v713 = vshll.u32 %v710, 16
  %v714 = vshrl.u32 %v710, 16
  %v715 = vshll.u32 %v711, 16
  %v716 = vshrl.u32 %v711, 16
  %vm717 = vc.u32 %v709, %v713
  %v718 = vsel %vm717, 1, 0
  %v719 = vadd.s32 %v709, %v713
  %v720 = vadd.s32 %v712, %v718
  %vm721 = vc.u32 %v719, %v715
  %v722 = vsel %vm721, 1, 0
  %v723 = vadd.s32 %v719, %v715
  %v724 = vadd.s32 %v720, %v722
  %v725 = vadd.s32 %v724, %v714
  %v726 = vadd.s32 %v725, %v716
  %v727 = vand.u32 %v704, 65535
  %v728 = vshrl.u32 %v704, 16
  %v729 = vand.u32 %v699, 65535
  %v730 = vshrl.u32 %v699, 16
  %v731 = vmul.u32 %v727, %v729
  %v732 = vmul.u32 %v727, %v730
  %v733 = vmul.u32 %v728, %v729
  %v734 = vmul.u32 %v728, %v730
  %v735 = vshll.u32 %v732, 16
  %v736 = vshrl.u32 %v732, 16
  %v737 = vshll.u32 %v733, 16
  %v738 = vshrl.u32 %v733, 16
  %vm739 = vc.u32 %v731, %v735
  %v740 = vsel %vm739, 1, 0
  %v741 = vadd.s32 %v731, %v735
  %v742 = vadd.s32 %v734, %v740
  %vm743 = vc.u32 %v741, %v737
  %v744 = vsel %vm743, 1, 0
  %v745 = vadd.s32 %v741, %v737
  %v746 = vadd.s32 %v742, %v744
  %v747 = vadd.s32 %v746, %v736
  %v748 = vadd.s32 %v747, %v738
  %v749 = vmul.u32 %v704, %v695
  %v750 = vadd.s32 %v726, %v745
  %vm751 = vc.u32 %v726, %v745
  %v752 = vadd.s32 %v748, 1
  %v753 = vsel %vm751, %v752, %v748
  %v754 = vadd.s32 %v749, %v753
  %v755 = vadd.s32 %v754, 536870912
  %v756 = vshrl.u32 %v755, 30
  %v757 = vshll.u32 %v756, 30
  %v758 = vsub.s32 %v754, %v757
  %vm759 = vcmp.lt.s32.totalorder %v758, 0
  %v760 = vsub.s32 0, %v758
  %v761 = vsel %vm759, %v760, %v758
  %v762 = vclz %v761
  %v763 = vsub.s32 %v762, 2
  %vm764 = vcmp.gt.s32.totalorder 0, %v763
  %v765 = vsel %vm764, 0, %v763
  %v766 = vsub.s32 32, %v765
  %v767 = vshll.u32 %v758, %v765
  %v768 = vshrl.u32 %v750, %v766
  %v769 = vor.u32 %v767, %v768
  %v770 = vsub.s32 4294967266, %v765
  %v771 = vadd.s32 %v770, 127
  %v772 = vshll.u32 %v771, 23
  %v773 = vor.u32 4788187, %v772
  %v774 = vand.u32 2147483647, %v773
  %v776 = vcvt.s32.f32 %v769
  %v777 = vmul.f32 %v776, %v774
  %v778 = vxor.u32 %v777, 2147483648
  %v779 = vsel %vm658, %v778, %v777
  %v780 = vsub.s32 4, %v756
  %v781 = vsel %vm658, %v780, %v756
  %v782 = vsel %vm657, %v28, %v779
  %v783 = vsel %vm657, 0, %v781
  %v784 = vmul.f32 %v782, %v782
  %v785 = vmul.f32 %v784, -0.001358992
  %v786 = vadd.f32 %v785, 0.041655596
  %v787 = vmul.f32 %v784, %v786
  %v788 = vadd.f32 %v787, -0.4999988
  %v789 = vmul.f32 %v784, %v788
  %v790 = vadd.f32 1.0, %v789
  %v791 = vmul.f32 %v782, %v782
  %v792 = vmul.f32 %v791, -0.00019511016
  %v793 = vadd.f32 %v792, 0.008332121
  %v794 = vmul.f32 %v791, %v793
  %v795 = vadd.f32 %v794, -0.16666654
  %v796 = vmul.f32 %v791, %v795
  %v797 = vadd.f32 %v796, 1.0
  %v798 = vmul.f32 %v797, %v782
  %vm799 = vweird.f32 %v28
  %v800 = vand.u32 %v783, 3
  %vm801 = vcmp.lt.s32.totalorder %v800, 2
  %vm802 = vcmp.eq.s32.totalorder %v800, 0
  %v803 = vxor.u32 %v798, 2147483648
  %v804 = vsel %vm802, %v790, %v803
  %vm805 = vcmp.eq.s32.totalorder %v800, 2
  %v806 = vxor.u32 %v790, 2147483648
  %v807 = vsel %vm805, %v806, %v798
  %v808 = vsel %vm801, %v804, %v807
  %v809 = vsel %vm799, nan, %v808
  %v810 = vand.u32 2147483647, %v29
  %vm811 = vcmp.le.f32.partialorder %v810, 0.7853982
  %vm812 = vcmp.lt.s32.totalorder %v29, 0
  %v813 = vand.u32 %v29, 2139095040
  %v814 = vshrl.u32 %v813, 23
  %v815 = vsub.s32 %v814, 127
  %v816 = vand.u32 2147483647, %v29
  %v817 = vand.u32 %v816, 8388607
  %v818 = vor.u32 %v817, 8388608
  %v819 = vsub.s32 0, %v818
  %v820 = vadd.s32 %v815, 1
  %vm821 = vcmp.gt.s32.totalorder %v820, 0
  %v822 = vsel %vm821, %v820, 0
  %v823 = vshrl.u32 %v822, 5
  %v824 = vand.u32 %v822, 31
  %v825 = vsub.s32 32, %v824
  %v826 = vshrl.u32 683565275, %v825
  %v827 = vshll.u32 683565275, %v824
  %v828 = vshrl.u32 2475754826, %v825
  %v829 = vor.u32 %v827, %v828
  %v830 = vshll.u32 2475754826, %v824
  %v831 = vshrl.u32 2131351028, %v825
  %v832 = vor.u32 %v830, %v831
  %v833 = vshll.u32 2131351028, %v824
  %v834 = vshrl.u32 2102212464, %v825
  %v835 = vor.u32 %v833, %v834
  %v836 = vshll.u32 2102212464, %v824
  %v837 = vshrl.u32 920167782, %v825
  %v838 = vor.u32 %v836, %v837
  %v839 = vshll.u32 920167782, %v824
  %v840 = vshrl.u32 1326507024, %v825
  %v841 = vor.u32 %v839, %v840
  %vm842 = vcmp.lt.s32.totalorder %v823, 1
  %vm843 = vcmp.lt.s32.totalorder %v823, 2
  %vm844 = vcmp.lt.s32.totalorder %v823, 3
  %vm845 = vcmp.lt.s32.totalorder %v823, 4
  %v846 = vsel %vm842, %v826, %v829
  %v847 = vsel %vm845, %v835, 2102212464
  %v848 = vsel %vm844, %v832, %v847
  %v849 = vsel %vm843, %v846, %v848
  %v850 = vsel %vm842, %v829, %v832
  %v851 = vsel %vm845, %v838, 920167782
  %v852 = vsel %vm844, %v835, %v851
  %v853 = vsel %vm843, %v850, %v852
  %v854 = vsel %vm842, %v832, %v835
  %v855 = vsel %vm845, %v841, 1326507024
  %v856 = vsel %vm844, %v838, %v855
  %v857 = vsel %vm843, %v854, %v856
  %v858 = vshll.u32 %v818, 8
  %v859 = vand.u32 %v858, 65535
  %v860 = vshrl.u32 %v858, 16
  %v861 = vand.u32 %v857, 65535
  %v862 = vshrl.u32 %v857, 16
  %v863 = vmul.u32 %v859, %v861
  %v864 = vmul.u32 %v859, %v862
  %v865 = vmul.u32 %v860, %v861
  %v866 = vmul.u32 %v860, %v862
  %v867 = vshll.u32 %v864, 16
  %v868 = vshrl.u32 %v864, 16
  %v869 = vshll.u32 %v865, 16
  %v870 = vshrl.u32 %v865, 16
  %vm871 = vc.u32 %v863, %v867
  %v872 = vsel %vm871, 1, 0
  %v873 = vadd.s32 %v863, %v867
  %v874 = vadd.s32 %v866, %v872
  %vm875 = vc.u32 %v873, %v869
  %v876 = vsel %vm875, 1, 0
  %v877 = vadd.s32 %v873, %v869
  %v878 = vadd.s32 %v874, %v876
  %v879 = vadd.s32 %v878, %v868
  %v880 = vadd.s32 %v879, %v870
  %v881 = vand.u32 %v858, 65535
  %v882 = vshrl.u32 %v858, 16
  %v883 = vand.u32 %v853, 65535
  %v884 = vshrl.u32 %v853, 16
  %v885 = vmul.u32 %v881, %v883
  %v886 = vmul.u32 %v881, %v884
  %v887 = vmul.u32 %v882, %v883
  %v888 = vmul.u32 %v882, %v884
  %v889 = vshll.u32 %v886, 16
  %v890 = vshrl.u32 %v886, 16
  %v891 = vshll.u32 %v887, 16
  %v892 = vshrl.u32 %v887, 16
  %vm893 = vc.u32 %v885, %v889
  %v894 = vsel %vm893, 1, 0
  %v895 = vadd.s32 %v885, %v889
  %v896 = vadd.s32 %v888, %v894
  %vm897 = vc.u32 %v895, %v891
  %v898 = vsel %vm897, 1, 0
  %v899 = vadd.s32 %v895, %v891
  %v900 = vadd.s32 %v896, %v898
  %v901 = vadd.s32 %v900, %v890
  %v902 = vadd.s32 %v901, %v892
  %v903 = vmul.u32 %v858, %v849
  %v904 = vadd.s32 %v880, %v899
  %vm905 = vc.u32 %v880, %v899
  %v906 = vadd.s32 %v902, 1
  %v907 = vsel %vm905, %v906, %v902
  %v908 = vadd.s32 %v903, %v907
  %v909 = vadd.s32 %v908, 536870912
  %v910 = vshrl.u32 %v909, 30
  %v911 = vshll.u32 %v910, 30
  %v912 = vsub.s32 %v908, %v911
  %vm913 = vcmp.lt.s32.totalorder %v912, 0
  %v914 = vsub.s32 0, %v912
  %v915 = vsel %vm913, %v914, %v912
  %v916 = vclz %v915
  %v917 = vsub.s32 %v916, 2
  %vm918 = vcmp.gt.s32.totalorder 0, %v917
  %v919 = vsel %vm918, 0, %v917
  %v920 = vsub.s32 32, %v919
  %v921 = vshll.u32 %v912, %v919
  %v922 = vshrl.u32 %v904, %v920
  %v923 = vor.u32 %v921, %v922
  %v924 = vsub.s32 4294967266, %v919
  %v925 = vadd.s32 %v924, 127
  %v926 = vshll.u32 %v925, 23
  %v927 = vor.u32 4788187, %v926
  %v928 = vand.u32 2147483647, %v927
  %v930 = vcvt.s32.f32 %v923
  %v931 = vmul.f32 %v930, %v928
  %v932 = vxor.u32 %v931, 2147483648
  %v933 = vsel %vm812, %v932, %v931
  %v934 = vsub.s32 4, %v910
  %v935 = vsel %vm812, %v934, %v910
  %v936 = vsel %vm811, %v29, %v933
  %v937 = vsel %vm811, 0, %v935
  %v938 = vmul.f32 %v936, %v936
  %v939 = vmul.f32 %v938, -0.001358992
  %v940 = vadd.f32 %v939, 0.041655596
  %v941 = vmul.f32 %v938, %v940
  %v942 = vadd.f32 %v941, -0.4999988
  %v943 = vmul.f32 %v938, %v942
  %v944 = vadd.f32 1.0, %v943
  %v945 = vmul.f32 %v936, %v936
  %v946 = vmul.f32 %v945, -0.00019511016
  %v947 = vadd.f32 %v946, 0.008332121
  %v948 = vmul.f32 %v945, %v947
  %v949 = vadd.f32 %v948, -0.16666654
  %v950 = vmul.f32 %v945, %v949
  %v951 = vadd.f32 %v950, 1.0
  %v952 = vmul.f32 %v951, %v936
  %vm953 = vweird.f32 %v29
  %v954 = vand.u32 %v937, 3
  %vm955 = vcmp.lt.s32.totalorder %v954, 2
  %vm956 = vcmp.eq.s32.totalorder %v954, 0
  %v957 = vxor.u32 %v952, 2147483648
  %v958 = vsel %vm956, %v944, %v957
  %vm959 = vcmp.eq.s32.totalorder %v954, 2
  %v960 = vxor.u32 %v944, 2147483648
  %v961 = vsel %vm959, %v960, %v952
  %v962 = vsel %vm955, %v958, %v961
  %v963 = vsel %vm953, nan, %v962
  %v964 = vand.u32 2147483647, %v30
  %vm965 = vcmp.le.f32.partialorder %v964, 0.7853982
  %vm966 = vcmp.lt.s32.totalorder %v30, 0
  %v967 = vand.u32 %v30, 2139095040
  %v968 = vshrl.u32 %v967, 23
  %v969 = vsub.s32 %v968, 127
  %v970 = vand.u32 2147483647, %v30
  %v971 = vand.u32 %v970, 8388607
  %v972 = vor.u32 %v971, 8388608
  %v973 = vsub.s32 0, %v972
  %v974 = vadd.s32 %v969, 1
  %vm975 = vcmp.gt.s32.totalorder %v974, 0
  %v976 = vsel %vm975, %v974, 0
  %v977 = vshrl.u32 %v976, 5
  %v978 = vand.u32 %v976, 31
  %v979 = vsub.s32 32, %v978
  %v980 = vshrl.u32 683565275, %v979
  %v981 = vshll.u32 683565275, %v978
  %v982 = vshrl.u32 2475754826, %v979
  %v983 = vor.u32 %v981, %v982
  %v984 = vshll.u32 2475754826, %v978
  %v985 = vshrl.u32 2131351028, %v979
  %v986 = vor.u32 %v984, %v985
  %v987 = vshll.u32 2131351028, %v978
  %v988 = vshrl.u32 2102212464, %v979
  %v989 = vor.u32 %v987, %v988
  %v990 = vshll.u32 2102212464, %v978
  %v991 = vshrl.u32 920167782, %v979
  %v992 = vor.u32 %v990, %v991
  %v993 = vshll.u32 920167782, %v978
  %v994 = vshrl.u32 1326507024, %v979
  %v995 = vor.u32 %v993, %v994
  %vm996 = vcmp.lt.s32.totalorder %v977, 1
  %vm997 = vcmp.lt.s32.totalorder %v977, 2
  %vm998 = vcmp.lt.s32.totalorder %v977, 3
  %vm999 = vcmp.lt.s32.totalorder %v977, 4
  %v1000 = vsel %vm996, %v980, %v983
  %v1001 = vsel %vm999, %v989, 2102212464
  %v1002 = vsel %vm998, %v986, %v1001
  %v1003 = vsel %vm997, %v1000, %v1002
  %v1004 = vsel %vm996, %v983, %v986
  %v1005 = vsel %vm999, %v992, 920167782
  %v1006 = vsel %vm998, %v989, %v1005
  %v1007 = vsel %vm997, %v1004, %v1006
  %v1008 = vsel %vm996, %v986, %v989
  %v1009 = vsel %vm999, %v995, 1326507024
  %v1010 = vsel %vm998, %v992, %v1009
  %v1011 = vsel %vm997, %v1008, %v1010
  %v1012 = vshll.u32 %v972, 8
  %v1013 = vand.u32 %v1012, 65535
  %v1014 = vshrl.u32 %v1012, 16
  %v1015 = vand.u32 %v1011, 65535
  %v1016 = vshrl.u32 %v1011, 16
  %v1017 = vmul.u32 %v1013, %v1015
  %v1018 = vmul.u32 %v1013, %v1016
  %v1019 = vmul.u32 %v1014, %v1015
  %v1020 = vmul.u32 %v1014, %v1016
  %v1021 = vshll.u32 %v1018, 16
  %v1022 = vshrl.u32 %v1018, 16
  %v1023 = vshll.u32 %v1019, 16
  %v1024 = vshrl.u32 %v1019, 16
  %vm1025 = vc.u32 %v1017, %v1021
  %v1026 = vsel %vm1025, 1, 0
  %v1027 = vadd.s32 %v1017, %v1021
  %v1028 = vadd.s32 %v1020, %v1026
  %vm1029 = vc.u32 %v1027, %v1023
  %v1030 = vsel %vm1029, 1, 0
  %v1031 = vadd.s32 %v1027, %v1023
  %v1032 = vadd.s32 %v1028, %v1030
  %v1033 = vadd.s32 %v1032, %v1022
  %v1034 = vadd.s32 %v1033, %v1024
  %v1035 = vand.u32 %v1012, 65535
  %v1036 = vshrl.u32 %v1012, 16
  %v1037 = vand.u32 %v1007, 65535
  %v1038 = vshrl.u32 %v1007, 16
  %v1039 = vmul.u32 %v1035, %v1037
  %v1040 = vmul.u32 %v1035, %v1038
  %v1041 = vmul.u32 %v1036, %v1037
  %v1042 = vmul.u32 %v1036, %v1038
  %v1043 = vshll.u32 %v1040, 16
  %v1044 = vshrl.u32 %v1040, 16
  %v1045 = vshll.u32 %v1041, 16
  %v1046 = vshrl.u32 %v1041, 16
  %vm1047 = vc.u32 %v1039, %v1043
  %v1048 = vsel %vm1047, 1, 0
  %v1049 = vadd.s32 %v1039, %v1043
  %v1050 = vadd.s32 %v1042, %v1048
  %vm1051 = vc.u32 %v1049, %v1045
  %v1052 = vsel %vm1051, 1, 0
  %v1053 = vadd.s32 %v1049, %v1045
  %v1054 = vadd.s32 %v1050, %v1052
  %v1055 = vadd.s32 %v1054, %v1044
  %v1056 = vadd.s32 %v1055, %v1046
  %v1057 = vmul.u32 %v1012, %v1003
  %v1058 = vadd.s32 %v1034, %v1053
  %vm1059 = vc.u32 %v1034, %v1053
  %v1060 = vadd.s32 %v1056, 1
  %v1061 = vsel %vm1059, %v1060, %v1056
  %v1062 = vadd.s32 %v1057, %v1061
  %v1063 = vadd.s32 %v1062, 536870912
  %v1064 = vshrl.u32 %v1063, 30
  %v1065 = vshll.u32 %v1064, 30
  %v1066 = vsub.s32 %v1062, %v1065
  %vm1067 = vcmp.lt.s32.totalorder %v1066, 0
  %v1068 = vsub.s32 0, %v1066
  %v1069 = vsel %vm1067, %v1068, %v1066
  %v1070 = vclz %v1069
  %v1071 = vsub.s32 %v1070, 2
  %vm1072 = vcmp.gt.s32.totalorder 0, %v1071
  %v1073 = vsel %vm1072, 0, %v1071
  %v1074 = vsub.s32 32, %v1073
  %v1075 = vshll.u32 %v1066, %v1073
  %v1076 = vshrl.u32 %v1058, %v1074
  %v1077 = vor.u32 %v1075, %v1076
  %v1078 = vsub.s32 4294967266, %v1073
  %v1079 = vadd.s32 %v1078, 127
  %v1080 = vshll.u32 %v1079, 23
  %v1081 = vor.u32 4788187, %v1080
  %v1082 = vand.u32 2147483647, %v1081
  %v1084 = vcvt.s32.f32 %v1077
  %v1085 = vmul.f32 %v1084, %v1082
  %v1086 = vxor.u32 %v1085, 2147483648
  %v1087 = vsel %vm966, %v1086, %v1085
  %v1088 = vsub.s32 4, %v1064
  %v1089 = vsel %vm966, %v1088, %v1064
  %v1090 = vsel %vm965, %v30, %v1087
  %v1091 = vsel %vm965, 0, %v1089
  %v1092 = vmul.f32 %v1090, %v1090
  %v1093 = vmul.f32 %v1092, -0.001358992
  %v1094 = vadd.f32 %v1093, 0.041655596
  %v1095 = vmul.f32 %v1092, %v1094
  %v1096 = vadd.f32 %v1095, -0.4999988
  %v1097 = vmul.f32 %v1092, %v1096
  %v1098 = vadd.f32 1.0, %v1097
  %v1099 = vmul.f32 %v1090, %v1090
  %v1100 = vmul.f32 %v1099, -0.00019511016
  %v1101 = vadd.f32 %v1100, 0.008332121
  %v1102 = vmul.f32 %v1099, %v1101
  %v1103 = vadd.f32 %v1102, -0.16666654
  %v1104 = vmul.f32 %v1099, %v1103
  %v1105 = vadd.f32 %v1104, 1.0
  %v1106 = vmul.f32 %v1105, %v1090
  %vm1107 = vweird.f32 %v30
  %v1108 = vand.u32 %v1091, 3
  %vm1109 = vcmp.lt.s32.totalorder %v1108, 2
  %vm1110 = vcmp.eq.s32.totalorder %v1108, 0
  %v1111 = vxor.u32 %v1106, 2147483648
  %v1112 = vsel %vm1110, %v1098, %v1111
  %vm1113 = vcmp.eq.s32.totalorder %v1108, 2
  %v1114 = vxor.u32 %v1098, 2147483648
  %v1115 = vsel %vm1113, %v1114, %v1106
  %v1116 = vsel %vm1109, %v1112, %v1115
  %v1117 = vsel %vm1107, nan, %v1116
  %v1118 = vand.u32 2147483647, %v31
  %vm1119 = vcmp.le.f32.partialorder %v1118, 0.7853982
  %vm1120 = vcmp.lt.s32.totalorder %v31, 0
  %v1121 = vand.u32 %v31, 2139095040
  %v1122 = vshrl.u32 %v1121, 23
  %v1123 = vsub.s32 %v1122, 127
  %v1124 = vand.u32 2147483647, %v31
  %v1125 = vand.u32 %v1124, 8388607
  %v1126 = vor.u32 %v1125, 8388608
  %v1127 = vsub.s32 0, %v1126
  %v1128 = vadd.s32 %v1123, 1
  %vm1129 = vcmp.gt.s32.totalorder %v1128, 0
  %v1130 = vsel %vm1129, %v1128, 0
  %v1131 = vshrl.u32 %v1130, 5
  %v1132 = vand.u32 %v1130, 31
  %v1133 = vsub.s32 32, %v1132
  %v1134 = vshrl.u32 683565275, %v1133
  %v1135 = vshll.u32 683565275, %v1132
  %v1136 = vshrl.u32 2475754826, %v1133
  %v1137 = vor.u32 %v1135, %v1136
  %v1138 = vshll.u32 2475754826, %v1132
  %v1139 = vshrl.u32 2131351028, %v1133
  %v1140 = vor.u32 %v1138, %v1139
  %v1141 = vshll.u32 2131351028, %v1132
  %v1142 = vshrl.u32 2102212464, %v1133
  %v1143 = vor.u32 %v1141, %v1142
  %v1144 = vshll.u32 2102212464, %v1132
  %v1145 = vshrl.u32 920167782, %v1133
  %v1146 = vor.u32 %v1144, %v1145
  %v1147 = vshll.u32 920167782, %v1132
  %v1148 = vshrl.u32 1326507024, %v1133
  %v1149 = vor.u32 %v1147, %v1148
  %vm1150 = vcmp.lt.s32.totalorder %v1131, 1
  %vm1151 = vcmp.lt.s32.totalorder %v1131, 2
  %vm1152 = vcmp.lt.s32.totalorder %v1131, 3
  %vm1153 = vcmp.lt.s32.totalorder %v1131, 4
  %v1154 = vsel %vm1150, %v1134, %v1137
  %v1155 = vsel %vm1153, %v1143, 2102212464
  %v1156 = vsel %vm1152, %v1140, %v1155
  %v1157 = vsel %vm1151, %v1154, %v1156
  %v1158 = vsel %vm1150, %v1137, %v1140
  %v1159 = vsel %vm1153, %v1146, 920167782
  %v1160 = vsel %vm1152, %v1143, %v1159
  %v1161 = vsel %vm1151, %v1158, %v1160
  %v1162 = vsel %vm1150, %v1140, %v1143
  %v1163 = vsel %vm1153, %v1149, 1326507024
  %v1164 = vsel %vm1152, %v1146, %v1163
  %v1165 = vsel %vm1151, %v1162, %v1164
  %v1166 = vshll.u32 %v1126, 8
  %v1167 = vand.u32 %v1166, 65535
  %v1168 = vshrl.u32 %v1166, 16
  %v1169 = vand.u32 %v1165, 65535
  %v1170 = vshrl.u32 %v1165, 16
  %v1171 = vmul.u32 %v1167, %v1169
  %v1172 = vmul.u32 %v1167, %v1170
  %v1173 = vmul.u32 %v1168, %v1169
  %v1174 = vmul.u32 %v1168, %v1170
  %v1175 = vshll.u32 %v1172, 16
  %v1176 = vshrl.u32 %v1172, 16
  %v1177 = vshll.u32 %v1173, 16
  %v1178 = vshrl.u32 %v1173, 16
  %vm1179 = vc.u32 %v1171, %v1175
  %v1180 = vsel %vm1179, 1, 0
  %v1181 = vadd.s32 %v1171, %v1175
  %v1182 = vadd.s32 %v1174, %v1180
  %vm1183 = vc.u32 %v1181, %v1177
  %v1184 = vsel %vm1183, 1, 0
  %v1185 = vadd.s32 %v1181, %v1177
  %v1186 = vadd.s32 %v1182, %v1184
  %v1187 = vadd.s32 %v1186, %v1176
  %v1188 = vadd.s32 %v1187, %v1178
  %v1189 = vand.u32 %v1166, 65535
  %v1190 = vshrl.u32 %v1166, 16
  %v1191 = vand.u32 %v1161, 65535
  %v1192 = vshrl.u32 %v1161, 16
  %v1193 = vmul.u32 %v1189, %v1191
  %v1194 = vmul.u32 %v1189, %v1192
  %v1195 = vmul.u32 %v1190, %v1191
  %v1196 = vmul.u32 %v1190, %v1192
  %v1197 = vshll.u32 %v1194, 16
  %v1198 = vshrl.u32 %v1194, 16
  %v1199 = vshll.u32 %v1195, 16
  %v1200 = vshrl.u32 %v1195, 16
  %vm1201 = vc.u32 %v1193, %v1197
  %v1202 = vsel %vm1201, 1, 0
  %v1203 = vadd.s32 %v1193, %v1197
  %v1204 = vadd.s32 %v1196, %v1202
  %vm1205 = vc.u32 %v1203, %v1199
  %v1206 = vsel %vm1205, 1, 0
  %v1207 = vadd.s32 %v1203, %v1199
  %v1208 = vadd.s32 %v1204, %v1206
  %v1209 = vadd.s32 %v1208, %v1198
  %v1210 = vadd.s32 %v1209, %v1200
  %v1211 = vmul.u32 %v1166, %v1157
  %v1212 = vadd.s32 %v1188, %v1207
  %vm1213 = vc.u32 %v1188, %v1207
  %v1214 = vadd.s32 %v1210, 1
  %v1215 = vsel %vm1213, %v1214, %v1210
  %v1216 = vadd.s32 %v1211, %v1215
  %v1217 = vadd.s32 %v1216, 536870912
  %v1218 = vshrl.u32 %v1217, 30
  %v1219 = vshll.u32 %v1218, 30
  %v1220 = vsub.s32 %v1216, %v1219
  %vm1221 = vcmp.lt.s32.totalorder %v1220, 0
  %v1222 = vsub.s32 0, %v1220
  %v1223 = vsel %vm1221, %v1222, %v1220
  %v1224 = vclz %v1223
  %v1225 = vsub.s32 %v1224, 2
  %vm1226 = vcmp.gt.s32.totalorder 0, %v1225
  %v1227 = vsel %vm1226, 0, %v1225
  %v1228 = vsub.s32 32, %v1227
  %v1229 = vshll.u32 %v1220, %v1227
  %v1230 = vshrl.u32 %v1212, %v1228
  %v1231 = vor.u32 %v1229, %v1230
  %v1232 = vsub.s32 4294967266, %v1227
  %v1233 = vadd.s32 %v1232, 127
  %v1234 = vshll.u32 %v1233, 23
  %v1235 = vor.u32 4788187, %v1234
  %v1236 = vand.u32 2147483647, %v1235
  %v1238 = vcvt.s32.f32 %v1231
  %v1239 = vmul.f32 %v1238, %v1236
  %v1240 = vxor.u32 %v1239, 2147483648
  %v1241 = vsel %vm1120, %v1240, %v1239
  %v1242 = vsub.s32 4, %v1218
  %v1243 = vsel %vm1120, %v1242, %v1218
  %v1244 = vsel %vm1119, %v31, %v1241
  %v1245 = vsel %vm1119, 0, %v1243
  %v1246 = vmul.f32 %v1244, %v1244
  %v1247 = vmul.f32 %v1246, -0.001358992
  %v1248 = vadd.f32 %v1247, 0.041655596
  %v1249 = vmul.f32 %v1246, %v1248
  %v1250 = vadd.f32 %v1249, -0.4999988
  %v1251 = vmul.f32 %v1246, %v1250
  %v1252 = vadd.f32 1.0, %v1251
  %v1253 = vmul.f32 %v1244, %v1244
  %v1254 = vmul.f32 %v1253, -0.00019511016
  %v1255 = vadd.f32 %v1254, 0.008332121
  %v1256 = vmul.f32 %v1253, %v1255
  %v1257 = vadd.f32 %v1256, -0.16666654
  %v1258 = vmul.f32 %v1253, %v1257
  %v1259 = vadd.f32 %v1258, 1.0
  %v1260 = vmul.f32 %v1259, %v1244
  %vm1261 = vweird.f32 %v31
  %v1262 = vand.u32 %v1245, 3
  %vm1263 = vcmp.lt.s32.totalorder %v1262, 2
  %vm1264 = vcmp.eq.s32.totalorder %v1262, 0
  %v1265 = vxor.u32 %v1260, 2147483648
  %v1266 = vsel %vm1264, %v1252, %v1265
  %vm1267 = vcmp.eq.s32.totalorder %v1262, 2
  %v1268 = vxor.u32 %v1252, 2147483648
  %v1269 = vsel %vm1267, %v1268, %v1260
  %v1270 = vsel %vm1263, %v1266, %v1269
  %v1271 = vsel %vm1261, nan, %v1270
  %v1272 = vand.u32 2147483647, %v32
  %vm1273 = vcmp.le.f32.partialorder %v1272, 0.7853982
  %vm1274 = vcmp.lt.s32.totalorder %v32, 0
  %v1275 = vand.u32 %v32, 2139095040
  %v1276 = vshrl.u32 %v1275, 23
  %v1277 = vsub.s32 %v1276, 127
  %v1278 = vand.u32 2147483647, %v32
  %v1279 = vand.u32 %v1278, 8388607
  %v1280 = vor.u32 %v1279, 8388608
  %v1281 = vsub.s32 0, %v1280
  %v1282 = vadd.s32 %v1277, 1
  %vm1283 = vcmp.gt.s32.totalorder %v1282, 0
  %v1284 = vsel %vm1283, %v1282, 0
  %v1285 = vshrl.u32 %v1284, 5
  %v1286 = vand.u32 %v1284, 31
  %v1287 = vsub.s32 32, %v1286
  %v1288 = vshrl.u32 683565275, %v1287
  %v1289 = vshll.u32 683565275, %v1286
  %v1290 = vshrl.u32 2475754826, %v1287
  %v1291 = vor.u32 %v1289, %v1290
  %v1292 = vshll.u32 2475754826, %v1286
  %v1293 = vshrl.u32 2131351028, %v1287
  %v1294 = vor.u32 %v1292, %v1293
  %v1295 = vshll.u32 2131351028, %v1286
  %v1296 = vshrl.u32 2102212464, %v1287
  %v1297 = vor.u32 %v1295, %v1296
  %v1298 = vshll.u32 2102212464, %v1286
  %v1299 = vshrl.u32 920167782, %v1287
  %v1300 = vor.u32 %v1298, %v1299
  %v1301 = vshll.u32 920167782, %v1286
  %v1302 = vshrl.u32 1326507024, %v1287
  %v1303 = vor.u32 %v1301, %v1302
  %vm1304 = vcmp.lt.s32.totalorder %v1285, 1
  %vm1305 = vcmp.lt.s32.totalorder %v1285, 2
  %vm1306 = vcmp.lt.s32.totalorder %v1285, 3
  %vm1307 = vcmp.lt.s32.totalorder %v1285, 4
  %v1308 = vsel %vm1304, %v1288, %v1291
  %v1309 = vsel %vm1307, %v1297, 2102212464
  %v1310 = vsel %vm1306, %v1294, %v1309
  %v1311 = vsel %vm1305, %v1308, %v1310
  %v1312 = vsel %vm1304, %v1291, %v1294
  %v1313 = vsel %vm1307, %v1300, 920167782
  %v1314 = vsel %vm1306, %v1297, %v1313
  %v1315 = vsel %vm1305, %v1312, %v1314
  %v1316 = vsel %vm1304, %v1294, %v1297
  %v1317 = vsel %vm1307, %v1303, 1326507024
  %v1318 = vsel %vm1306, %v1300, %v1317
  %v1319 = vsel %vm1305, %v1316, %v1318
  %v1320 = vshll.u32 %v1280, 8
  %v1321 = vand.u32 %v1320, 65535
  %v1322 = vshrl.u32 %v1320, 16
  %v1323 = vand.u32 %v1319, 65535
  %v1324 = vshrl.u32 %v1319, 16
  %v1325 = vmul.u32 %v1321, %v1323
  %v1326 = vmul.u32 %v1321, %v1324
  %v1327 = vmul.u32 %v1322, %v1323
  %v1328 = vmul.u32 %v1322, %v1324
  %v1329 = vshll.u32 %v1326, 16
  %v1330 = vshrl.u32 %v1326, 16
  %v1331 = vshll.u32 %v1327, 16
  %v1332 = vshrl.u32 %v1327, 16
  %vm1333 = vc.u32 %v1325, %v1329
  %v1334 = vsel %vm1333, 1, 0
  %v1335 = vadd.s32 %v1325, %v1329
  %v1336 = vadd.s32 %v1328, %v1334
  %vm1337 = vc.u32 %v1335, %v1331
  %v1338 = vsel %vm1337, 1, 0
  %v1339 = vadd.s32 %v1335, %v1331
  %v1340 = vadd.s32 %v1336, %v1338
  %v1341 = vadd.s32 %v1340, %v1330
  %v1342 = vadd.s32 %v1341, %v1332
  %v1343 = vand.u32 %v1320, 65535
  %v1344 = vshrl.u32 %v1320, 16
  %v1345 = vand.u32 %v1315, 65535
  %v1346 = vshrl.u32 %v1315, 16
  %v1347 = vmul.u32 %v1343, %v1345
  %v1348 = vmul.u32 %v1343, %v1346
  %v1349 = vmul.u32 %v1344, %v1345
  %v1350 = vmul.u32 %v1344, %v1346
  %v1351 = vshll.u32 %v1348, 16
  %v1352 = vshrl.u32 %v1348, 16
  %v1353 = vshll.u32 %v1349, 16
  %v1354 = vshrl.u32 %v1349, 16
  %vm1355 = vc.u32 %v1347, %v1351
  %v1356 = vsel %vm1355, 1, 0
  %v1357 = vadd.s32 %v1347, %v1351
  %v1358 = vadd.s32 %v1350, %v1356
  %vm1359 = vc.u32 %v1357, %v1353
  %v1360 = vsel %vm1359, 1, 0
  %v1361 = vadd.s32 %v1357, %v1353
  %v1362 = vadd.s32 %v1358, %v1360
  %v1363 = vadd.s32 %v1362, %v1352
  %v1364 = vadd.s32 %v1363, %v1354
  %v1365 = vmul.u32 %v1320, %v1311
  %v1366 = vadd.s32 %v1342, %v1361
  %vm1367 = vc.u32 %v1342, %v1361
  %v1368 = vadd.s32 %v1364, 1
  %v1369 = vsel %vm1367, %v1368, %v1364
  %v1370 = vadd.s32 %v1365, %v1369
  %v1371 = vadd.s32 %v1370, 536870912
  %v1372 = vshrl.u32 %v1371, 30
  %v1373 = vshll.u32 %v1372, 30
  %v1374 = vsub.s32 %v1370, %v1373
  %vm1375 = vcmp.lt.s32.totalorder %v1374, 0
  %v1376 = vsub.s32 0, %v1374
  %v1377 = vsel %vm1375, %v1376, %v1374
  %v1378 = vclz %v1377
  %v1379 = vsub.s32 %v1378, 2
  %vm1380 = vcmp.gt.s32.totalorder 0, %v1379
  %v1381 = vsel %vm1380, 0, %v1379
  %v1382 = vsub.s32 32, %v1381
  %v1383 = vshll.u32 %v1374, %v1381
  %v1384 = vshrl.u32 %v1366, %v1382
  %v1385 = vor.u32 %v1383, %v1384
  %v1386 = vsub.s32 4294967266, %v1381
  %v1387 = vadd.s32 %v1386, 127
  %v1388 = vshll.u32 %v1387, 23
  %v1389 = vor.u32 4788187, %v1388
  %v1390 = vand.u32 2147483647, %v1389
  %v1392 = vcvt.s32.f32 %v1385
  %v1393 = vmul.f32 %v1392, %v1390
  %v1394 = vxor.u32 %v1393, 2147483648
  %v1395 = vsel %vm1274, %v1394, %v1393
  %v1396 = vsub.s32 4, %v1372
  %v1397 = vsel %vm1274, %v1396, %v1372
  %v1398 = vsel %vm1273, %v32, %v1395
  %v1399 = vsel %vm1273, 0, %v1397
  %v1400 = vmul.f32 %v1398, %v1398
  %v1401 = vmul.f32 %v1400, -0.001358992
  %v1402 = vadd.f32 %v1401, 0.041655596
  %v1403 = vmul.f32 %v1400, %v1402
  %v1404 = vadd.f32 %v1403, -0.4999988
  %v1405 = vmul.f32 %v1400, %v1404
  %v1406 = vadd.f32 1.0, %v1405
  %v1407 = vmul.f32 %v1398, %v1398
  %v1408 = vmul.f32 %v1407, -0.00019511016
  %v1409 = vadd.f32 %v1408, 0.008332121
  %v1410 = vmul.f32 %v1407, %v1409
  %v1411 = vadd.f32 %v1410, -0.16666654
  %v1412 = vmul.f32 %v1407, %v1411
  %v1413 = vadd.f32 %v1412, 1.0
  %v1414 = vmul.f32 %v1413, %v1398
  %vm1415 = vweird.f32 %v32
  %v1416 = vand.u32 %v1399, 3
  %vm1417 = vcmp.lt.s32.totalorder %v1416, 2
  %vm1418 = vcmp.eq.s32.totalorder %v1416, 0
  %v1419 = vxor.u32 %v1414, 2147483648
  %v1420 = vsel %vm1418, %v1406, %v1419
  %vm1421 = vcmp.eq.s32.totalorder %v1416, 2
  %v1422 = vxor.u32 %v1406, 2147483648
  %v1423 = vsel %vm1421, %v1422, %v1414
  %v1424 = vsel %vm1417, %v1420, %v1423
  %v1425 = vsel %vm1415, nan, %v1424
  %v1426 = vand.u32 2147483647, %v33
  %vm1427 = vcmp.le.f32.partialorder %v1426, 0.7853982
  %vm1428 = vcmp.lt.s32.totalorder %v33, 0
  %v1429 = vand.u32 %v33, 2139095040
  %v1430 = vshrl.u32 %v1429, 23
  %v1431 = vsub.s32 %v1430, 127
  %v1432 = vand.u32 2147483647, %v33
  %v1433 = vand.u32 %v1432, 8388607
  %v1434 = vor.u32 %v1433, 8388608
  %v1435 = vsub.s32 0, %v1434
  %v1436 = vadd.s32 %v1431, 1
  %vm1437 = vcmp.gt.s32.totalorder %v1436, 0
  %v1438 = vsel %vm1437, %v1436, 0
  %v1439 = vshrl.u32 %v1438, 5
  %v1440 = vand.u32 %v1438, 31
  %v1441 = vsub.s32 32, %v1440
  %v1442 = vshrl.u32 683565275, %v1441
  %v1443 = vshll.u32 683565275, %v1440
  %v1444 = vshrl.u32 2475754826, %v1441
  %v1445 = vor.u32 %v1443, %v1444
  %v1446 = vshll.u32 2475754826, %v1440
  %v1447 = vshrl.u32 2131351028, %v1441
  %v1448 = vor.u32 %v1446, %v1447
  %v1449 = vshll.u32 2131351028, %v1440
  %v1450 = vshrl.u32 2102212464, %v1441
  %v1451 = vor.u32 %v1449, %v1450
  %v1452 = vshll.u32 2102212464, %v1440
  %v1453 = vshrl.u32 920167782, %v1441
  %v1454 = vor.u32 %v1452, %v1453
  %v1455 = vshll.u32 920167782, %v1440
  %v1456 = vshrl.u32 1326507024, %v1441
  %v1457 = vor.u32 %v1455, %v1456
  %vm1458 = vcmp.lt.s32.totalorder %v1439, 1
  %vm1459 = vcmp.lt.s32.totalorder %v1439, 2
  %vm1460 = vcmp.lt.s32.totalorder %v1439, 3
  %vm1461 = vcmp.lt.s32.totalorder %v1439, 4
  %v1462 = vsel %vm1458, %v1442, %v1445
  %v1463 = vsel %vm1461, %v1451, 2102212464
  %v1464 = vsel %vm1460, %v1448, %v1463
  %v1465 = vsel %vm1459, %v1462, %v1464
  %v1466 = vsel %vm1458, %v1445, %v1448
  %v1467 = vsel %vm1461, %v1454, 920167782
  %v1468 = vsel %vm1460, %v1451, %v1467
  %v1469 = vsel %vm1459, %v1466, %v1468
  %v1470 = vsel %vm1458, %v1448, %v1451
  %v1471 = vsel %vm1461, %v1457, 1326507024
  %v1472 = vsel %vm1460, %v1454, %v1471
  %v1473 = vsel %vm1459, %v1470, %v1472
  %v1474 = vshll.u32 %v1434, 8
  %v1475 = vand.u32 %v1474, 65535
  %v1476 = vshrl.u32 %v1474, 16
  %v1477 = vand.u32 %v1473, 65535
  %v1478 = vshrl.u32 %v1473, 16
  %v1479 = vmul.u32 %v1475, %v1477
  %v1480 = vmul.u32 %v1475, %v1478
  %v1481 = vmul.u32 %v1476, %v1477
  %v1482 = vmul.u32 %v1476, %v1478
  %v1483 = vshll.u32 %v1480, 16
  %v1484 = vshrl.u32 %v1480, 16
  %v1485 = vshll.u32 %v1481, 16
  %v1486 = vshrl.u32 %v1481, 16
  %vm1487 = vc.u32 %v1479, %v1483
  %v1488 = vsel %vm1487, 1, 0
  %v1489 = vadd.s32 %v1479, %v1483
  %v1490 = vadd.s32 %v1482, %v1488
  %vm1491 = vc.u32 %v1489, %v1485
  %v1492 = vsel %vm1491, 1, 0
  %v1493 = vadd.s32 %v1489, %v1485
  %v1494 = vadd.s32 %v1490, %v1492
  %v1495 = vadd.s32 %v1494, %v1484
  %v1496 = vadd.s32 %v1495, %v1486
  %v1497 = vand.u32 %v1474, 65535
  %v1498 = vshrl.u32 %v1474, 16
  %v1499 = vand.u32 %v1469, 65535
  %v1500 = vshrl.u32 %v1469, 16
  %v1501 = vmul.u32 %v1497, %v1499
  %v1502 = vmul.u32 %v1497, %v1500
  %v1503 = vmul.u32 %v1498, %v1499
  %v1504 = vmul.u32 %v1498, %v1500
  %v1505 = vshll.u32 %v1502, 16
  %v1506 = vshrl.u32 %v1502, 16
  %v1507 = vshll.u32 %v1503, 16
  %v1508 = vshrl.u32 %v1503, 16
  %vm1509 = vc.u32 %v1501, %v1505
  %v1510 = vsel %vm1509, 1, 0
  %v1511 = vadd.s32 %v1501, %v1505
  %v1512 = vadd.s32 %v1504, %v1510
  %vm1513 = vc.u32 %v1511, %v1507
  %v1514 = vsel %vm1513, 1, 0
  %v1515 = vadd.s32 %v1511, %v1507
  %v1516 = vadd.s32 %v1512, %v1514
  %v1517 = vadd.s32 %v1516, %v1506
  %v1518 = vadd.s32 %v1517, %v1508
  %v1519 = vmul.u32 %v1474, %v1465
  %v1520 = vadd.s32 %v1496, %v1515
  %vm1521 = vc.u32 %v1496, %v1515
  %v1522 = vadd.s32 %v1518, 1
  %v1523 = vsel %vm1521, %v1522, %v1518
  %v1524 = vadd.s32 %v1519, %v1523
  %v1525 = vadd.s32 %v1524, 536870912
  %v1526 = vshrl.u32 %v1525, 30
  %v1527 = vshll.u32 %v1526, 30
  %v1528 = vsub.s32 %v1524, %v1527
  %vm1529 = vcmp.lt.s32.totalorder %v1528, 0
  %v1530 = vsub.s32 0, %v1528
  %v1531 = vsel %vm1529, %v1530, %v1528
  %v1532 = vclz %v1531
  %v1533 = vsub.s32 %v1532, 2
  %vm1534 = vcmp.gt.s32.totalorder 0, %v1533
  %v1535 = vsel %vm1534, 0, %v1533
  %v1536 = vsub.s32 32, %v1535
  %v1537 = vshll.u32 %v1528, %v1535
  %v1538 = vshrl.u32 %v1520, %v1536
  %v1539 = vor.u32 %v1537, %v1538
  %v1540 = vsub.s32 4294967266, %v1535
  %v1541 = vadd.s32 %v1540, 127
  %v1542 = vshll.u32 %v1541, 23
  %v1543 = vor.u32 4788187, %v1542
  %v1544 = vand.u32 2147483647, %v1543
  %v1546 = vcvt.s32.f32 %v1539
  %v1547 = vmul.f32 %v1546, %v1544
  %v1548 = vxor.u32 %v1547, 2147483648
  %v1549 = vsel %vm1428, %v1548, %v1547
  %v1550 = vsub.s32 4, %v1526
  %v1551 = vsel %vm1428, %v1550, %v1526
  %v1552 = vsel %vm1427, %v33, %v1549
  %v1553 = vsel %vm1427, 0, %v1551
  %v1554 = vmul.f32 %v1552, %v1552
  %v1555 = vmul.f32 %v1554, -0.001358992
  %v1556 = vadd.f32 %v1555, 0.041655596
  %v1557 = vmul.f32 %v1554, %v1556
  %v1558 = vadd.f32 %v1557, -0.4999988
  %v1559 = vmul.f32 %v1554, %v1558
  %v1560 = vadd.f32 1.0, %v1559
  %v1561 = vmul.f32 %v1552, %v1552
  %v1562 = vmul.f32 %v1561, -0.00019511016
  %v1563 = vadd.f32 %v1562, 0.008332121
  %v1564 = vmul.f32 %v1561, %v1563
  %v1565 = vadd.f32 %v1564, -0.16666654
  %v1566 = vmul.f32 %v1561, %v1565
  %v1567 = vadd.f32 %v1566, 1.0
  %v1568 = vmul.f32 %v1567, %v1552
  %vm1569 = vweird.f32 %v33
  %v1570 = vand.u32 %v1553, 3
  %vm1571 = vcmp.lt.s32.totalorder %v1570, 2
  %vm1572 = vcmp.eq.s32.totalorder %v1570, 0
  %v1573 = vxor.u32 %v1568, 2147483648
  %v1574 = vsel %vm1572, %v1560, %v1573
  %vm1575 = vcmp.eq.s32.totalorder %v1570, 2
  %v1576 = vxor.u32 %v1560, 2147483648
  %v1577 = vsel %vm1575, %v1576, %v1568
  %v1578 = vsel %vm1571, %v1574, %v1577
  %v1579 = vsel %vm1569, nan, %v1578
  %v1580 = vand.u32 2147483647, %v34
  %vm1581 = vcmp.le.f32.partialorder %v1580, 0.7853982
  %vm1582 = vcmp.lt.s32.totalorder %v34, 0
  %v1583 = vand.u32 %v34, 2139095040
  %v1584 = vshrl.u32 %v1583, 23
  %v1585 = vsub.s32 %v1584, 127
  %v1586 = vand.u32 2147483647, %v34
  %v1587 = vand.u32 %v1586, 8388607
  %v1588 = vor.u32 %v1587, 8388608
  %v1589 = vsub.s32 0, %v1588
  %v1590 = vadd.s32 %v1585, 1
  %vm1591 = vcmp.gt.s32.totalorder %v1590, 0
  %v1592 = vsel %vm1591, %v1590, 0
  %v1593 = vshrl.u32 %v1592, 5
  %v1594 = vand.u32 %v1592, 31
  %v1595 = vsub.s32 32, %v1594
  %v1596 = vshrl.u32 683565275, %v1595
  %v1597 = vshll.u32 683565275, %v1594
  %v1598 = vshrl.u32 2475754826, %v1595
  %v1599 = vor.u32 %v1597, %v1598
  %v1600 = vshll.u32 2475754826, %v1594
  %v1601 = vshrl.u32 2131351028, %v1595
  %v1602 = vor.u32 %v1600, %v1601
  %v1603 = vshll.u32 2131351028, %v1594
  %v1604 = vshrl.u32 2102212464, %v1595
  %v1605 = vor.u32 %v1603, %v1604
  %v1606 = vshll.u32 2102212464, %v1594
  %v1607 = vshrl.u32 920167782, %v1595
  %v1608 = vor.u32 %v1606, %v1607
  %v1609 = vshll.u32 920167782, %v1594
  %v1610 = vshrl.u32 1326507024, %v1595
  %v1611 = vor.u32 %v1609, %v1610
  %vm1612 = vcmp.lt.s32.totalorder %v1593, 1
  %vm1613 = vcmp.lt.s32.totalorder %v1593, 2
  %vm1614 = vcmp.lt.s32.totalorder %v1593, 3
  %vm1615 = vcmp.lt.s32.totalorder %v1593, 4
  %v1616 = vsel %vm1612, %v1596, %v1599
  %v1617 = vsel %vm1615, %v1605, 2102212464
  %v1618 = vsel %vm1614, %v1602, %v1617
  %v1619 = vsel %vm1613, %v1616, %v1618
  %v1620 = vsel %vm1612, %v1599, %v1602
  %v1621 = vsel %vm1615, %v1608, 920167782
  %v1622 = vsel %vm1614, %v1605, %v1621
  %v1623 = vsel %vm1613, %v1620, %v1622
  %v1624 = vsel %vm1612, %v1602, %v1605
  %v1625 = vsel %vm1615, %v1611, 1326507024
  %v1626 = vsel %vm1614, %v1608, %v1625
  %v1627 = vsel %vm1613, %v1624, %v1626
  %v1628 = vshll.u32 %v1588, 8
  %v1629 = vand.u32 %v1628, 65535
  %v1630 = vshrl.u32 %v1628, 16
  %v1631 = vand.u32 %v1627, 65535
  %v1632 = vshrl.u32 %v1627, 16
  %v1633 = vmul.u32 %v1629, %v1631
  %v1634 = vmul.u32 %v1629, %v1632
  %v1635 = vmul.u32 %v1630, %v1631
  %v1636 = vmul.u32 %v1630, %v1632
  %v1637 = vshll.u32 %v1634, 16
  %v1638 = vshrl.u32 %v1634, 16
  %v1639 = vshll.u32 %v1635, 16
  %v1640 = vshrl.u32 %v1635, 16
  %vm1641 = vc.u32 %v1633, %v1637
  %v1642 = vsel %vm1641, 1, 0
  %v1643 = vadd.s32 %v1633, %v1637
  %v1644 = vadd.s32 %v1636, %v1642
  %vm1645 = vc.u32 %v1643, %v1639
  %v1646 = vsel %vm1645, 1, 0
  %v1647 = vadd.s32 %v1643, %v1639
  %v1648 = vadd.s32 %v1644, %v1646
  %v1649 = vadd.s32 %v1648, %v1638
  %v1650 = vadd.s32 %v1649, %v1640
  %v1651 = vand.u32 %v1628, 65535
  %v1652 = vshrl.u32 %v1628, 16
  %v1653 = vand.u32 %v1623, 65535
  %v1654 = vshrl.u32 %v1623, 16
  %v1655 = vmul.u32 %v1651, %v1653
  %v1656 = vmul.u32 %v1651, %v1654
  %v1657 = vmul.u32 %v1652, %v1653
  %v1658 = vmul.u32 %v1652, %v1654
  %v1659 = vshll.u32 %v1656, 16
  %v1660 = vshrl.u32 %v1656, 16
  %v1661 = vshll.u32 %v1657, 16
  %v1662 = vshrl.u32 %v1657, 16
  %vm1663 = vc.u32 %v1655, %v1659
  %v1664 = vsel %vm1663, 1, 0
  %v1665 = vadd.s32 %v1655, %v1659
  %v1666 = vadd.s32 %v1658, %v1664
  %vm1667 = vc.u32 %v1665, %v1661
  %v1668 = vsel %vm1667, 1, 0
  %v1669 = vadd.s32 %v1665, %v1661
  %v1670 = vadd.s32 %v1666, %v1668
  %v1671 = vadd.s32 %v1670, %v1660
  %v1672 = vadd.s32 %v1671, %v1662
  %v1673 = vmul.u32 %v1628, %v1619
  %v1674 = vadd.s32 %v1650, %v1669
  %vm1675 = vc.u32 %v1650, %v1669
  %v1676 = vadd.s32 %v1672, 1
  %v1677 = vsel %vm1675, %v1676, %v1672
  %v1678 = vadd.s32 %v1673, %v1677
  %v1679 = vadd.s32 %v1678, 536870912
  %v1680 = vshrl.u32 %v1679, 30
  %v1681 = vshll.u32 %v1680, 30
  %v1682 = vsub.s32 %v1678, %v1681
  %vm1683 = vcmp.lt.s32.totalorder %v1682, 0
  %v1684 = vsub.s32 0, %v1682
  %v1685 = vsel %vm1683, %v1684, %v1682
  %v1686 = vclz %v1685
  %v1687 = vsub.s32 %v1686, 2
  %vm1688 = vcmp.gt.s32.totalorder 0, %v1687
  %v1689 = vsel %vm1688, 0, %v1687
  %v1690 = vsub.s32 32, %v1689
  %v1691 = vshll.u32 %v1682, %v1689
  %v1692 = vshrl.u32 %v1674, %v1690
  %v1693 = vor.u32 %v1691, %v1692
  %v1694 = vsub.s32 4294967266, %v1689
  %v1695 = vadd.s32 %v1694, 127
  %v1696 = vshll.u32 %v1695, 23
  %v1697 = vor.u32 4788187, %v1696
  %v1698 = vand.u32 2147483647, %v1697
  %v1700 = vcvt.s32.f32 %v1693
  %v1701 = vmul.f32 %v1700, %v1698
  %v1702 = vxor.u32 %v1701, 2147483648
  %v1703 = vsel %vm1582, %v1702, %v1701
  %v1704 = vsub.s32 4, %v1680
  %v1705 = vsel %vm1582, %v1704, %v1680
  %v1706 = vsel %vm1581, %v34, %v1703
  %v1707 = vsel %vm1581, 0, %v1705
  %v1708 = vmul.f32 %v1706, %v1706
  %v1709 = vmul.f32 %v1708, -0.001358992
  %v1710 = vadd.f32 %v1709, 0.041655596
  %v1711 = vmul.f32 %v1708, %v1710
  %v1712 = vadd.f32 %v1711, -0.4999988
  %v1713 = vmul.f32 %v1708, %v1712
  %v1714 = vadd.f32 1.0, %v1713
  %v1715 = vmul.f32 %v1706, %v1706
  %v1716 = vmul.f32 %v1715, -0.00019511016
  %v1717 = vadd.f32 %v1716, 0.008332121
  %v1718 = vmul.f32 %v1715, %v1717
  %v1719 = vadd.f32 %v1718, -0.16666654
  %v1720 = vmul.f32 %v1715, %v1719
  %v1721 = vadd.f32 %v1720, 1.0
  %v1722 = vmul.f32 %v1721, %v1706
  %vm1723 = vweird.f32 %v34
  %v1724 = vand.u32 %v1707, 3
  %vm1725 = vcmp.lt.s32.totalorder %v1724, 2
  %vm1726 = vcmp.eq.s32.totalorder %v1724, 0
  %v1727 = vxor.u32 %v1722, 2147483648
  %v1728 = vsel %vm1726, %v1714, %v1727
  %vm1729 = vcmp.eq.s32.totalorder %v1724, 2
  %v1730 = vxor.u32 %v1714, 2147483648
  %v1731 = vsel %vm1729, %v1730, %v1722
  %v1732 = vsel %vm1725, %v1728, %v1731
  %v1733 = vsel %vm1723, nan, %v1732
  %v1734 = vand.u32 2147483647, %v35
  %vm1735 = vcmp.le.f32.partialorder %v1734, 0.7853982
  %vm1736 = vcmp.lt.s32.totalorder %v35, 0
  %v1737 = vand.u32 %v35, 2139095040
  %v1738 = vshrl.u32 %v1737, 23
  %v1739 = vsub.s32 %v1738, 127
  %v1740 = vand.u32 2147483647, %v35
  %v1741 = vand.u32 %v1740, 8388607
  %v1742 = vor.u32 %v1741, 8388608
  %v1743 = vsub.s32 0, %v1742
  %v1744 = vadd.s32 %v1739, 1
  %vm1745 = vcmp.gt.s32.totalorder %v1744, 0
  %v1746 = vsel %vm1745, %v1744, 0
  %v1747 = vshrl.u32 %v1746, 5
  %v1748 = vand.u32 %v1746, 31
  %v1749 = vsub.s32 32, %v1748
  %v1750 = vshrl.u32 683565275, %v1749
  %v1751 = vshll.u32 683565275, %v1748
  %v1752 = vshrl.u32 2475754826, %v1749
  %v1753 = vor.u32 %v1751, %v1752
  %v1754 = vshll.u32 2475754826, %v1748
  %v1755 = vshrl.u32 2131351028, %v1749
  %v1756 = vor.u32 %v1754, %v1755
  %v1757 = vshll.u32 2131351028, %v1748
  %v1758 = vshrl.u32 2102212464, %v1749
  %v1759 = vor.u32 %v1757, %v1758
  %v1760 = vshll.u32 2102212464, %v1748
  %v1761 = vshrl.u32 920167782, %v1749
  %v1762 = vor.u32 %v1760, %v1761
  %v1763 = vshll.u32 920167782, %v1748
  %v1764 = vshrl.u32 1326507024, %v1749
  %v1765 = vor.u32 %v1763, %v1764
  %vm1766 = vcmp.lt.s32.totalorder %v1747, 1
  %vm1767 = vcmp.lt.s32.totalorder %v1747, 2
  %vm1768 = vcmp.lt.s32.totalorder %v1747, 3
  %vm1769 = vcmp.lt.s32.totalorder %v1747, 4
  %v1770 = vsel %vm1766, %v1750, %v1753
  %v1771 = vsel %vm1769, %v1759, 2102212464
  %v1772 = vsel %vm1768, %v1756, %v1771
  %v1773 = vsel %vm1767, %v1770, %v1772
  %v1774 = vsel %vm1766, %v1753, %v1756
  %v1775 = vsel %vm1769, %v1762, 920167782
  %v1776 = vsel %vm1768, %v1759, %v1775
  %v1777 = vsel %vm1767, %v1774, %v1776
  %v1778 = vsel %vm1766, %v1756, %v1759
  %v1779 = vsel %vm1769, %v1765, 1326507024
  %v1780 = vsel %vm1768, %v1762, %v1779
  %v1781 = vsel %vm1767, %v1778, %v1780
  %v1782 = vshll.u32 %v1742, 8
  %v1783 = vand.u32 %v1782, 65535
  %v1784 = vshrl.u32 %v1782, 16
  %v1785 = vand.u32 %v1781, 65535
  %v1786 = vshrl.u32 %v1781, 16
  %v1787 = vmul.u32 %v1783, %v1785
  %v1788 = vmul.u32 %v1783, %v1786
  %v1789 = vmul.u32 %v1784, %v1785
  %v1790 = vmul.u32 %v1784, %v1786
  %v1791 = vshll.u32 %v1788, 16
  %v1792 = vshrl.u32 %v1788, 16
  %v1793 = vshll.u32 %v1789, 16
  %v1794 = vshrl.u32 %v1789, 16
  %vm1795 = vc.u32 %v1787, %v1791
  %v1796 = vsel %vm1795, 1, 0
  %v1797 = vadd.s32 %v1787, %v1791
  %v1798 = vadd.s32 %v1790, %v1796
  %vm1799 = vc.u32 %v1797, %v1793
  %v1800 = vsel %vm1799, 1, 0
  %v1801 = vadd.s32 %v1797, %v1793
  %v1802 = vadd.s32 %v1798, %v1800
  %v1803 = vadd.s32 %v1802, %v1792
  %v1804 = vadd.s32 %v1803, %v1794
  %v1805 = vand.u32 %v1782, 65535
  %v1806 = vshrl.u32 %v1782, 16
  %v1807 = vand.u32 %v1777, 65535
  %v1808 = vshrl.u32 %v1777, 16
  %v1809 = vmul.u32 %v1805, %v1807
  %v1810 = vmul.u32 %v1805, %v1808
  %v1811 = vmul.u32 %v1806, %v1807
  %v1812 = vmul.u32 %v1806, %v1808
  %v1813 = vshll.u32 %v1810, 16
  %v1814 = vshrl.u32 %v1810, 16
  %v1815 = vshll.u32 %v1811, 16
  %v1816 = vshrl.u32 %v1811, 16
  %vm1817 = vc.u32 %v1809, %v1813
  %v1818 = vsel %vm1817, 1, 0
  %v1819 = vadd.s32 %v1809, %v1813
  %v1820 = vadd.s32 %v1812, %v1818
  %vm1821 = vc.u32 %v1819, %v1815
  %v1822 = vsel %vm1821, 1, 0
  %v1823 = vadd.s32 %v1819, %v1815
  %v1824 = vadd.s32 %v1820, %v1822
  %v1825 = vadd.s32 %v1824, %v1814
  %v1826 = vadd.s32 %v1825, %v1816
  %v1827 = vmul.u32 %v1782, %v1773
  %v1828 = vadd.s32 %v1804, %v1823
  %vm1829 = vc.u32 %v1804, %v1823
  %v1830 = vadd.s32 %v1826, 1
  %v1831 = vsel %vm1829, %v1830, %v1826
  %v1832 = vadd.s32 %v1827, %v1831
  %v1833 = vadd.s32 %v1832, 536870912
  %v1834 = vshrl.u32 %v1833, 30
  %v1835 = vshll.u32 %v1834, 30
  %v1836 = vsub.s32 %v1832, %v1835
  %vm1837 = vcmp.lt.s32.totalorder %v1836, 0
  %v1838 = vsub.s32 0, %v1836
  %v1839 = vsel %vm1837, %v1838, %v1836
  %v1840 = vclz %v1839
  %v1841 = vsub.s32 %v1840, 2
  %vm1842 = vcmp.gt.s32.totalorder 0, %v1841
  %v1843 = vsel %vm1842, 0, %v1841
  %v1844 = vsub.s32 32, %v1843
  %v1845 = vshll.u32 %v1836, %v1843
  %v1846 = vshrl.u32 %v1828, %v1844
  %v1847 = vor.u32 %v1845, %v1846
  %v1848 = vsub.s32 4294967266, %v1843
  %v1849 = vadd.s32 %v1848, 127
  %v1850 = vshll.u32 %v1849, 23
  %v1851 = vor.u32 4788187, %v1850
  %v1852 = vand.u32 2147483647, %v1851
  %v1854 = vcvt.s32.f32 %v1847
  %v1855 = vmul.f32 %v1854, %v1852
  %v1856 = vxor.u32 %v1855, 2147483648
  %v1857 = vsel %vm1736, %v1856, %v1855
  %v1858 = vsub.s32 4, %v1834
  %v1859 = vsel %vm1736, %v1858, %v1834
  %v1860 = vsel %vm1735, %v35, %v1857
  %v1861 = vsel %vm1735, 0, %v1859
  %v1862 = vmul.f32 %v1860, %v1860
  %v1863 = vmul.f32 %v1862, -0.001358992
  %v1864 = vadd.f32 %v1863, 0.041655596
  %v1865 = vmul.f32 %v1862, %v1864
  %v1866 = vadd.f32 %v1865, -0.4999988
  %v1867 = vmul.f32 %v1862, %v1866
  %v1868 = vadd.f32 1.0, %v1867
  %v1869 = vmul.f32 %v1860, %v1860
  %v1870 = vmul.f32 %v1869, -0.00019511016
  %v1871 = vadd.f32 %v1870, 0.008332121
  %v1872 = vmul.f32 %v1869, %v1871
  %v1873 = vadd.f32 %v1872, -0.16666654
  %v1874 = vmul.f32 %v1869, %v1873
  %v1875 = vadd.f32 %v1874, 1.0
  %v1876 = vmul.f32 %v1875, %v1860
  %vm1877 = vweird.f32 %v35
  %v1878 = vand.u32 %v1861, 3
  %vm1879 = vcmp.lt.s32.totalorder %v1878, 2
  %vm1880 = vcmp.eq.s32.totalorder %v1878, 0
  %v1881 = vxor.u32 %v1876, 2147483648
  %v1882 = vsel %vm1880, %v1868, %v1881
  %vm1883 = vcmp.eq.s32.totalorder %v1878, 2
  %v1884 = vxor.u32 %v1868, 2147483648
  %v1885 = vsel %vm1883, %v1884, %v1876
  %v1886 = vsel %vm1879, %v1882, %v1885
  %v1887 = vsel %vm1877, nan, %v1886
  %v1888 = vand.u32 2147483647, %v36
  %vm1889 = vcmp.le.f32.partialorder %v1888, 0.7853982
  %vm1890 = vcmp.lt.s32.totalorder %v36, 0
  %v1891 = vand.u32 %v36, 2139095040
  %v1892 = vshrl.u32 %v1891, 23
  %v1893 = vsub.s32 %v1892, 127
  %v1894 = vand.u32 2147483647, %v36
  %v1895 = vand.u32 %v1894, 8388607
  %v1896 = vor.u32 %v1895, 8388608
  %v1897 = vsub.s32 0, %v1896
  %v1898 = vadd.s32 %v1893, 1
  %vm1899 = vcmp.gt.s32.totalorder %v1898, 0
  %v1900 = vsel %vm1899, %v1898, 0
  %v1901 = vshrl.u32 %v1900, 5
  %v1902 = vand.u32 %v1900, 31
  %v1903 = vsub.s32 32, %v1902
  %v1904 = vshrl.u32 683565275, %v1903
  %v1905 = vshll.u32 683565275, %v1902
  %v1906 = vshrl.u32 2475754826, %v1903
  %v1907 = vor.u32 %v1905, %v1906
  %v1908 = vshll.u32 2475754826, %v1902
  %v1909 = vshrl.u32 2131351028, %v1903
  %v1910 = vor.u32 %v1908, %v1909
  %v1911 = vshll.u32 2131351028, %v1902
  %v1912 = vshrl.u32 2102212464, %v1903
  %v1913 = vor.u32 %v1911, %v1912
  %v1914 = vshll.u32 2102212464, %v1902
  %v1915 = vshrl.u32 920167782, %v1903
  %v1916 = vor.u32 %v1914, %v1915
  %v1917 = vshll.u32 920167782, %v1902
  %v1918 = vshrl.u32 1326507024, %v1903
  %v1919 = vor.u32 %v1917, %v1918
  %vm1920 = vcmp.lt.s32.totalorder %v1901, 1
  %vm1921 = vcmp.lt.s32.totalorder %v1901, 2
  %vm1922 = vcmp.lt.s32.totalorder %v1901, 3
  %vm1923 = vcmp.lt.s32.totalorder %v1901, 4
  %v1924 = vsel %vm1920, %v1904, %v1907
  %v1925 = vsel %vm1923, %v1913, 2102212464
  %v1926 = vsel %vm1922, %v1910, %v1925
  %v1927 = vsel %vm1921, %v1924, %v1926
  %v1928 = vsel %vm1920, %v1907, %v1910
  %v1929 = vsel %vm1923, %v1916, 920167782
  %v1930 = vsel %vm1922, %v1913, %v1929
  %v1931 = vsel %vm1921, %v1928, %v1930
  %v1932 = vsel %vm1920, %v1910, %v1913
  %v1933 = vsel %vm1923, %v1919, 1326507024
  %v1934 = vsel %vm1922, %v1916, %v1933
  %v1935 = vsel %vm1921, %v1932, %v1934
  %v1936 = vshll.u32 %v1896, 8
  %v1937 = vand.u32 %v1936, 65535
  %v1938 = vshrl.u32 %v1936, 16
  %v1939 = vand.u32 %v1935, 65535
  %v1940 = vshrl.u32 %v1935, 16
  %v1941 = vmul.u32 %v1937, %v1939
  %v1942 = vmul.u32 %v1937, %v1940
  %v1943 = vmul.u32 %v1938, %v1939
  %v1944 = vmul.u32 %v1938, %v1940
  %v1945 = vshll.u32 %v1942, 16
  %v1946 = vshrl.u32 %v1942, 16
  %v1947 = vshll.u32 %v1943, 16
  %v1948 = vshrl.u32 %v1943, 16
  %vm1949 = vc.u32 %v1941, %v1945
  %v1950 = vsel %vm1949, 1, 0
  %v1951 = vadd.s32 %v1941, %v1945
  %v1952 = vadd.s32 %v1944, %v1950
  %vm1953 = vc.u32 %v1951, %v1947
  %v1954 = vsel %vm1953, 1, 0
  %v1955 = vadd.s32 %v1951, %v1947
  %v1956 = vadd.s32 %v1952, %v1954
  %v1957 = vadd.s32 %v1956, %v1946
  %v1958 = vadd.s32 %v1957, %v1948
  %v1959 = vand.u32 %v1936, 65535
  %v1960 = vshrl.u32 %v1936, 16
  %v1961 = vand.u32 %v1931, 65535
  %v1962 = vshrl.u32 %v1931, 16
  %v1963 = vmul.u32 %v1959, %v1961
  %v1964 = vmul.u32 %v1959, %v1962
  %v1965 = vmul.u32 %v1960, %v1961
  %v1966 = vmul.u32 %v1960, %v1962
  %v1967 = vshll.u32 %v1964, 16
  %v1968 = vshrl.u32 %v1964, 16
  %v1969 = vshll.u32 %v1965, 16
  %v1970 = vshrl.u32 %v1965, 16
  %vm1971 = vc.u32 %v1963, %v1967
  %v1972 = vsel %vm1971, 1, 0
  %v1973 = vadd.s32 %v1963, %v1967
  %v1974 = vadd.s32 %v1966, %v1972
  %vm1975 = vc.u32 %v1973, %v1969
  %v1976 = vsel %vm1975, 1, 0
  %v1977 = vadd.s32 %v1973, %v1969
  %v1978 = vadd.s32 %v1974, %v1976
  %v1979 = vadd.s32 %v1978, %v1968
  %v1980 = vadd.s32 %v1979, %v1970
  %v1981 = vmul.u32 %v1936, %v1927
  %v1982 = vadd.s32 %v1958, %v1977
  %vm1983 = vc.u32 %v1958, %v1977
  %v1984 = vadd.s32 %v1980, 1
  %v1985 = vsel %vm1983, %v1984, %v1980
  %v1986 = vadd.s32 %v1981, %v1985
  %v1987 = vadd.s32 %v1986, 536870912
  %v1988 = vshrl.u32 %v1987, 30
  %v1989 = vshll.u32 %v1988, 30
  %v1990 = vsub.s32 %v1986, %v1989
  %vm1991 = vcmp.lt.s32.totalorder %v1990, 0
  %v1992 = vsub.s32 0, %v1990
  %v1993 = vsel %vm1991, %v1992, %v1990
  %v1994 = vclz %v1993
  %v1995 = vsub.s32 %v1994, 2
  %vm1996 = vcmp.gt.s32.totalorder 0, %v1995
  %v1997 = vsel %vm1996, 0, %v1995
  %v1998 = vsub.s32 32, %v1997
  %v1999 = vshll.u32 %v1990, %v1997
  %v2000 = vshrl.u32 %v1982, %v1998
  %v2001 = vor.u32 %v1999, %v2000
  %v2002 = vsub.s32 4294967266, %v1997
  %v2003 = vadd.s32 %v2002, 127
  %v2004 = vshll.u32 %v2003, 23
  %v2005 = vor.u32 4788187, %v2004
  %v2006 = vand.u32 2147483647, %v2005
  %v2008 = vcvt.s32.f32 %v2001
  %v2009 = vmul.f32 %v2008, %v2006
  %v2010 = vxor.u32 %v2009, 2147483648
  %v2011 = vsel %vm1890, %v2010, %v2009
  %v2012 = vsub.s32 4, %v1988
  %v2013 = vsel %vm1890, %v2012, %v1988
  %v2014 = vsel %vm1889, %v36, %v2011
  %v2015 = vsel %vm1889, 0, %v2013
  %v2016 = vmul.f32 %v2014, %v2014
  %v2017 = vmul.f32 %v2016, -0.001358992
  %v2018 = vadd.f32 %v2017, 0.041655596
  %v2019 = vmul.f32 %v2016, %v2018
  %v2020 = vadd.f32 %v2019, -0.4999988
  %v2021 = vmul.f32 %v2016, %v2020
  %v2022 = vadd.f32 1.0, %v2021
  %v2023 = vmul.f32 %v2014, %v2014
  %v2024 = vmul.f32 %v2023, -0.00019511016
  %v2025 = vadd.f32 %v2024, 0.008332121
  %v2026 = vmul.f32 %v2023, %v2025
  %v2027 = vadd.f32 %v2026, -0.16666654
  %v2028 = vmul.f32 %v2023, %v2027
  %v2029 = vadd.f32 %v2028, 1.0
  %v2030 = vmul.f32 %v2029, %v2014
  %vm2031 = vweird.f32 %v36
  %v2032 = vand.u32 %v2015, 3
  %vm2033 = vcmp.lt.s32.totalorder %v2032, 2
  %vm2034 = vcmp.eq.s32.totalorder %v2032, 0
  %v2035 = vxor.u32 %v2030, 2147483648
  %v2036 = vsel %vm2034, %v2022, %v2035
  %vm2037 = vcmp.eq.s32.totalorder %v2032, 2
  %v2038 = vxor.u32 %v2022, 2147483648
  %v2039 = vsel %vm2037, %v2038, %v2030
  %v2040 = vsel %vm2033, %v2036, %v2039
  %v2041 = vsel %vm2031, nan, %v2040
  %v2042 = vand.u32 2147483647, %v37
  %vm2043 = vcmp.le.f32.partialorder %v2042, 0.7853982
  %vm2044 = vcmp.lt.s32.totalorder %v37, 0
  %v2045 = vand.u32 %v37, 2139095040
  %v2046 = vshrl.u32 %v2045, 23
  %v2047 = vsub.s32 %v2046, 127
  %v2048 = vand.u32 2147483647, %v37
  %v2049 = vand.u32 %v2048, 8388607
  %v2050 = vor.u32 %v2049, 8388608
  %v2051 = vsub.s32 0, %v2050
  %v2052 = vadd.s32 %v2047, 1
  %vm2053 = vcmp.gt.s32.totalorder %v2052, 0
  %v2054 = vsel %vm2053, %v2052, 0
  %v2055 = vshrl.u32 %v2054, 5
  %v2056 = vand.u32 %v2054, 31
  %v2057 = vsub.s32 32, %v2056
  %v2058 = vshrl.u32 683565275, %v2057
  %v2059 = vshll.u32 683565275, %v2056
  %v2060 = vshrl.u32 2475754826, %v2057
  %v2061 = vor.u32 %v2059, %v2060
  %v2062 = vshll.u32 2475754826, %v2056
  %v2063 = vshrl.u32 2131351028, %v2057
  %v2064 = vor.u32 %v2062, %v2063
  %v2065 = vshll.u32 2131351028, %v2056
  %v2066 = vshrl.u32 2102212464, %v2057
  %v2067 = vor.u32 %v2065, %v2066
  %v2068 = vshll.u32 2102212464, %v2056
  %v2069 = vshrl.u32 920167782, %v2057
  %v2070 = vor.u32 %v2068, %v2069
  %v2071 = vshll.u32 920167782, %v2056
  %v2072 = vshrl.u32 1326507024, %v2057
  %v2073 = vor.u32 %v2071, %v2072
  %vm2074 = vcmp.lt.s32.totalorder %v2055, 1
  %vm2075 = vcmp.lt.s32.totalorder %v2055, 2
  %vm2076 = vcmp.lt.s32.totalorder %v2055, 3
  %vm2077 = vcmp.lt.s32.totalorder %v2055, 4
  %v2078 = vsel %vm2074, %v2058, %v2061
  %v2079 = vsel %vm2077, %v2067, 2102212464
  %v2080 = vsel %vm2076, %v2064, %v2079
  %v2081 = vsel %vm2075, %v2078, %v2080
  %v2082 = vsel %vm2074, %v2061, %v2064
  %v2083 = vsel %vm2077, %v2070, 920167782
  %v2084 = vsel %vm2076, %v2067, %v2083
  %v2085 = vsel %vm2075, %v2082, %v2084
  %v2086 = vsel %vm2074, %v2064, %v2067
  %v2087 = vsel %vm2077, %v2073, 1326507024
  %v2088 = vsel %vm2076, %v2070, %v2087
  %v2089 = vsel %vm2075, %v2086, %v2088
  %v2090 = vshll.u32 %v2050, 8
  %v2091 = vand.u32 %v2090, 65535
  %v2092 = vshrl.u32 %v2090, 16
  %v2093 = vand.u32 %v2089, 65535
  %v2094 = vshrl.u32 %v2089, 16
  %v2095 = vmul.u32 %v2091, %v2093
  %v2096 = vmul.u32 %v2091, %v2094
  %v2097 = vmul.u32 %v2092, %v2093
  %v2098 = vmul.u32 %v2092, %v2094
  %v2099 = vshll.u32 %v2096, 16
  %v2100 = vshrl.u32 %v2096, 16
  %v2101 = vshll.u32 %v2097, 16
  %v2102 = vshrl.u32 %v2097, 16
  %vm2103 = vc.u32 %v2095, %v2099
  %v2104 = vsel %vm2103, 1, 0
  %v2105 = vadd.s32 %v2095, %v2099
  %v2106 = vadd.s32 %v2098, %v2104
  %vm2107 = vc.u32 %v2105, %v2101
  %v2108 = vsel %vm2107, 1, 0
  %v2109 = vadd.s32 %v2105, %v2101
  %v2110 = vadd.s32 %v2106, %v2108
  %v2111 = vadd.s32 %v2110, %v2100
  %v2112 = vadd.s32 %v2111, %v2102
  %v2113 = vand.u32 %v2090, 65535
  %v2114 = vshrl.u32 %v2090, 16
  %v2115 = vand.u32 %v2085, 65535
  %v2116 = vshrl.u32 %v2085, 16
  %v2117 = vmul.u32 %v2113, %v2115
  %v2118 = vmul.u32 %v2113, %v2116
  %v2119 = vmul.u32 %v2114, %v2115
  %v2120 = vmul.u32 %v2114, %v2116
  %v2121 = vshll.u32 %v2118, 16
  %v2122 = vshrl.u32 %v2118, 16
  %v2123 = vshll.u32 %v2119, 16
  %v2124 = vshrl.u32 %v2119, 16
  %vm2125 = vc.u32 %v2117, %v2121
  %v2126 = vsel %vm2125, 1, 0
  %v2127 = vadd.s32 %v2117, %v2121
  %v2128 = vadd.s32 %v2120, %v2126
  %vm2129 = vc.u32 %v2127, %v2123
  %v2130 = vsel %vm2129, 1, 0
  %v2131 = vadd.s32 %v2127, %v2123
  %v2132 = vadd.s32 %v2128, %v2130
  %v2133 = vadd.s32 %v2132, %v2122
  %v2134 = vadd.s32 %v2133, %v2124
  %v2135 = vmul.u32 %v2090, %v2081
  %v2136 = vadd.s32 %v2112, %v2131
  %vm2137 = vc.u32 %v2112, %v2131
  %v2138 = vadd.s32 %v2134, 1
  %v2139 = vsel %vm2137, %v2138, %v2134
  %v2140 = vadd.s32 %v2135, %v2139
  %v2141 = vadd.s32 %v2140, 536870912
  %v2142 = vshrl.u32 %v2141, 30
  %v2143 = vshll.u32 %v2142, 30
  %v2144 = vsub.s32 %v2140, %v2143
  %vm2145 = vcmp.lt.s32.totalorder %v2144, 0
  %v2146 = vsub.s32 0, %v2144
  %v2147 = vsel %vm2145, %v2146, %v2144
  %v2148 = vclz %v2147
  %v2149 = vsub.s32 %v2148, 2
  %vm2150 = vcmp.gt.s32.totalorder 0, %v2149
  %v2151 = vsel %vm2150, 0, %v2149
  %v2152 = vsub.s32 32, %v2151
  %v2153 = vshll.u32 %v2144, %v2151
  %v2154 = vshrl.u32 %v2136, %v2152
  %v2155 = vor.u32 %v2153, %v2154
  %v2156 = vsub.s32 4294967266, %v2151
  %v2157 = vadd.s32 %v2156, 127
  %v2158 = vshll.u32 %v2157, 23
  %v2159 = vor.u32 4788187, %v2158
  %v2160 = vand.u32 2147483647, %v2159
  %v2162 = vcvt.s32.f32 %v2155
  %v2163 = vmul.f32 %v2162, %v2160
  %v2164 = vxor.u32 %v2163, 2147483648
  %v2165 = vsel %vm2044, %v2164, %v2163
  %v2166 = vsub.s32 4, %v2142
  %v2167 = vsel %vm2044, %v2166, %v2142
  %v2168 = vsel %vm2043, %v37, %v2165
  %v2169 = vsel %vm2043, 0, %v2167
  %v2170 = vmul.f32 %v2168, %v2168
  %v2171 = vmul.f32 %v2170, -0.001358992
  %v2172 = vadd.f32 %v2171, 0.041655596
  %v2173 = vmul.f32 %v2170, %v2172
  %v2174 = vadd.f32 %v2173, -0.4999988
  %v2175 = vmul.f32 %v2170, %v2174
  %v2176 = vadd.f32 1.0, %v2175
  %v2177 = vmul.f32 %v2168, %v2168
  %v2178 = vmul.f32 %v2177, -0.00019511016
  %v2179 = vadd.f32 %v2178, 0.008332121
  %v2180 = vmul.f32 %v2177, %v2179
  %v2181 = vadd.f32 %v2180, -0.16666654
  %v2182 = vmul.f32 %v2177, %v2181
  %v2183 = vadd.f32 %v2182, 1.0
  %v2184 = vmul.f32 %v2183, %v2168
  %vm2185 = vweird.f32 %v37
  %v2186 = vand.u32 %v2169, 3
  %vm2187 = vcmp.lt.s32.totalorder %v2186, 2
  %vm2188 = vcmp.eq.s32.totalorder %v2186, 0
  %v2189 = vxor.u32 %v2184, 2147483648
  %v2190 = vsel %vm2188, %v2176, %v2189
  %vm2191 = vcmp.eq.s32.totalorder %v2186, 2
  %v2192 = vxor.u32 %v2176, 2147483648
  %v2193 = vsel %vm2191, %v2192, %v2184
  %v2194 = vsel %vm2187, %v2190, %v2193
  %v2195 = vsel %vm2185, nan, %v2194
  %v2196 = vand.u32 2147483647, %v38
  %vm2197 = vcmp.le.f32.partialorder %v2196, 0.7853982
  %vm2198 = vcmp.lt.s32.totalorder %v38, 0
  %v2199 = vand.u32 %v38, 2139095040
  %v2200 = vshrl.u32 %v2199, 23
  %v2201 = vsub.s32 %v2200, 127
  %v2202 = vand.u32 2147483647, %v38
  %v2203 = vand.u32 %v2202, 8388607
  %v2204 = vor.u32 %v2203, 8388608
  %v2205 = vsub.s32 0, %v2204
  %v2206 = vadd.s32 %v2201, 1
  %vm2207 = vcmp.gt.s32.totalorder %v2206, 0
  %v2208 = vsel %vm2207, %v2206, 0
  %v2209 = vshrl.u32 %v2208, 5
  %v2210 = vand.u32 %v2208, 31
  %v2211 = vsub.s32 32, %v2210
  %v2212 = vshrl.u32 683565275, %v2211
  %v2213 = vshll.u32 683565275, %v2210
  %v2214 = vshrl.u32 2475754826, %v2211
  %v2215 = vor.u32 %v2213, %v2214
  %v2216 = vshll.u32 2475754826, %v2210
  %v2217 = vshrl.u32 2131351028, %v2211
  %v2218 = vor.u32 %v2216, %v2217
  %v2219 = vshll.u32 2131351028, %v2210
  %v2220 = vshrl.u32 2102212464, %v2211
  %v2221 = vor.u32 %v2219, %v2220
  %v2222 = vshll.u32 2102212464, %v2210
  %v2223 = vshrl.u32 920167782, %v2211
  %v2224 = vor.u32 %v2222, %v2223
  %v2225 = vshll.u32 920167782, %v2210
  %v2226 = vshrl.u32 1326507024, %v2211
  %v2227 = vor.u32 %v2225, %v2226
  %vm2228 = vcmp.lt.s32.totalorder %v2209, 1
  %vm2229 = vcmp.lt.s32.totalorder %v2209, 2
  %vm2230 = vcmp.lt.s32.totalorder %v2209, 3
  %vm2231 = vcmp.lt.s32.totalorder %v2209, 4
  %v2232 = vsel %vm2228, %v2212, %v2215
  %v2233 = vsel %vm2231, %v2221, 2102212464
  %v2234 = vsel %vm2230, %v2218, %v2233
  %v2235 = vsel %vm2229, %v2232, %v2234
  %v2236 = vsel %vm2228, %v2215, %v2218
  %v2237 = vsel %vm2231, %v2224, 920167782
  %v2238 = vsel %vm2230, %v2221, %v2237
  %v2239 = vsel %vm2229, %v2236, %v2238
  %v2240 = vsel %vm2228, %v2218, %v2221
  %v2241 = vsel %vm2231, %v2227, 1326507024
  %v2242 = vsel %vm2230, %v2224, %v2241
  %v2243 = vsel %vm2229, %v2240, %v2242
  %v2244 = vshll.u32 %v2204, 8
  %v2245 = vand.u32 %v2244, 65535
  %v2246 = vshrl.u32 %v2244, 16
  %v2247 = vand.u32 %v2243, 65535
  %v2248 = vshrl.u32 %v2243, 16
  %v2249 = vmul.u32 %v2245, %v2247
  %v2250 = vmul.u32 %v2245, %v2248
  %v2251 = vmul.u32 %v2246, %v2247
  %v2252 = vmul.u32 %v2246, %v2248
  %v2253 = vshll.u32 %v2250, 16
  %v2254 = vshrl.u32 %v2250, 16
  %v2255 = vshll.u32 %v2251, 16
  %v2256 = vshrl.u32 %v2251, 16
  %vm2257 = vc.u32 %v2249, %v2253
  %v2258 = vsel %vm2257, 1, 0
  %v2259 = vadd.s32 %v2249, %v2253
  %v2260 = vadd.s32 %v2252, %v2258
  %vm2261 = vc.u32 %v2259, %v2255
  %v2262 = vsel %vm2261, 1, 0
  %v2263 = vadd.s32 %v2259, %v2255
  %v2264 = vadd.s32 %v2260, %v2262
  %v2265 = vadd.s32 %v2264, %v2254
  %v2266 = vadd.s32 %v2265, %v2256
  %v2267 = vand.u32 %v2244, 65535
  %v2268 = vshrl.u32 %v2244, 16
  %v2269 = vand.u32 %v2239, 65535
  %v2270 = vshrl.u32 %v2239, 16
  %v2271 = vmul.u32 %v2267, %v2269
  %v2272 = vmul.u32 %v2267, %v2270
  %v2273 = vmul.u32 %v2268, %v2269
  %v2274 = vmul.u32 %v2268, %v2270
  %v2275 = vshll.u32 %v2272, 16
  %v2276 = vshrl.u32 %v2272, 16
  %v2277 = vshll.u32 %v2273, 16
  %v2278 = vshrl.u32 %v2273, 16
  %vm2279 = vc.u32 %v2271, %v2275
  %v2280 = vsel %vm2279, 1, 0
  %v2281 = vadd.s32 %v2271, %v2275
  %v2282 = vadd.s32 %v2274, %v2280
  %vm2283 = vc.u32 %v2281, %v2277
  %v2284 = vsel %vm2283, 1, 0
  %v2285 = vadd.s32 %v2281, %v2277
  %v2286 = vadd.s32 %v2282, %v2284
  %v2287 = vadd.s32 %v2286, %v2276
  %v2288 = vadd.s32 %v2287, %v2278
  %v2289 = vmul.u32 %v2244, %v2235
  %v2290 = vadd.s32 %v2266, %v2285
  %vm2291 = vc.u32 %v2266, %v2285
  %v2292 = vadd.s32 %v2288, 1
  %v2293 = vsel %vm2291, %v2292, %v2288
  %v2294 = vadd.s32 %v2289, %v2293
  %v2295 = vadd.s32 %v2294, 536870912
  %v2296 = vshrl.u32 %v2295, 30
  %v2297 = vshll.u32 %v2296, 30
  %v2298 = vsub.s32 %v2294, %v2297
  %vm2299 = vcmp.lt.s32.totalorder %v2298, 0
  %v2300 = vsub.s32 0, %v2298
  %v2301 = vsel %vm2299, %v2300, %v2298
  %v2302 = vclz %v2301
  %v2303 = vsub.s32 %v2302, 2
  %vm2304 = vcmp.gt.s32.totalorder 0, %v2303
  %v2305 = vsel %vm2304, 0, %v2303
  %v2306 = vsub.s32 32, %v2305
  %v2307 = vshll.u32 %v2298, %v2305
  %v2308 = vshrl.u32 %v2290, %v2306
  %v2309 = vor.u32 %v2307, %v2308
  %v2310 = vsub.s32 4294967266, %v2305
  %v2311 = vadd.s32 %v2310, 127
  %v2312 = vshll.u32 %v2311, 23
  %v2313 = vor.u32 4788187, %v2312
  %v2314 = vand.u32 2147483647, %v2313
  %v2316 = vcvt.s32.f32 %v2309
  %v2317 = vmul.f32 %v2316, %v2314
  %v2318 = vxor.u32 %v2317, 2147483648
  %v2319 = vsel %vm2198, %v2318, %v2317
  %v2320 = vsub.s32 4, %v2296
  %v2321 = vsel %vm2198, %v2320, %v2296
  %v2322 = vsel %vm2197, %v38, %v2319
  %v2323 = vsel %vm2197, 0, %v2321
  %v2324 = vmul.f32 %v2322, %v2322
  %v2325 = vmul.f32 %v2324, -0.001358992
  %v2326 = vadd.f32 %v2325, 0.041655596
  %v2327 = vmul.f32 %v2324, %v2326
  %v2328 = vadd.f32 %v2327, -0.4999988
  %v2329 = vmul.f32 %v2324, %v2328
  %v2330 = vadd.f32 1.0, %v2329
  %v2331 = vmul.f32 %v2322, %v2322
  %v2332 = vmul.f32 %v2331, -0.00019511016
  %v2333 = vadd.f32 %v2332, 0.008332121
  %v2334 = vmul.f32 %v2331, %v2333
  %v2335 = vadd.f32 %v2334, -0.16666654
  %v2336 = vmul.f32 %v2331, %v2335
  %v2337 = vadd.f32 %v2336, 1.0
  %v2338 = vmul.f32 %v2337, %v2322
  %vm2339 = vweird.f32 %v38
  %v2340 = vand.u32 %v2323, 3
  %vm2341 = vcmp.lt.s32.totalorder %v2340, 2
  %vm2342 = vcmp.eq.s32.totalorder %v2340, 0
  %v2343 = vxor.u32 %v2338, 2147483648
  %v2344 = vsel %vm2342, %v2330, %v2343
  %vm2345 = vcmp.eq.s32.totalorder %v2340, 2
  %v2346 = vxor.u32 %v2330, 2147483648
  %v2347 = vsel %vm2345, %v2346, %v2338
  %v2348 = vsel %vm2341, %v2344, %v2347
  %v2349 = vsel %vm2339, nan, %v2348
  %v2350 = vand.u32 2147483647, %v39
  %vm2351 = vcmp.le.f32.partialorder %v2350, 0.7853982
  %vm2352 = vcmp.lt.s32.totalorder %v39, 0
  %v2353 = vand.u32 %v39, 2139095040
  %v2354 = vshrl.u32 %v2353, 23
  %v2355 = vsub.s32 %v2354, 127
  %v2356 = vand.u32 2147483647, %v39
  %v2357 = vand.u32 %v2356, 8388607
  %v2358 = vor.u32 %v2357, 8388608
  %v2359 = vsub.s32 0, %v2358
  %v2360 = vadd.s32 %v2355, 1
  %vm2361 = vcmp.gt.s32.totalorder %v2360, 0
  %v2362 = vsel %vm2361, %v2360, 0
  %v2363 = vshrl.u32 %v2362, 5
  %v2364 = vand.u32 %v2362, 31
  %v2365 = vsub.s32 32, %v2364
  %v2366 = vshrl.u32 683565275, %v2365
  %v2367 = vshll.u32 683565275, %v2364
  %v2368 = vshrl.u32 2475754826, %v2365
  %v2369 = vor.u32 %v2367, %v2368
  %v2370 = vshll.u32 2475754826, %v2364
  %v2371 = vshrl.u32 2131351028, %v2365
  %v2372 = vor.u32 %v2370, %v2371
  %v2373 = vshll.u32 2131351028, %v2364
  %v2374 = vshrl.u32 2102212464, %v2365
  %v2375 = vor.u32 %v2373, %v2374
  %v2376 = vshll.u32 2102212464, %v2364
  %v2377 = vshrl.u32 920167782, %v2365
  %v2378 = vor.u32 %v2376, %v2377
  %v2379 = vshll.u32 920167782, %v2364
  %v2380 = vshrl.u32 1326507024, %v2365
  %v2381 = vor.u32 %v2379, %v2380
  %vm2382 = vcmp.lt.s32.totalorder %v2363, 1
  %vm2383 = vcmp.lt.s32.totalorder %v2363, 2
  %vm2384 = vcmp.lt.s32.totalorder %v2363, 3
  %vm2385 = vcmp.lt.s32.totalorder %v2363, 4
  %v2386 = vsel %vm2382, %v2366, %v2369
  %v2387 = vsel %vm2385, %v2375, 2102212464
  %v2388 = vsel %vm2384, %v2372, %v2387
  %v2389 = vsel %vm2383, %v2386, %v2388
  %v2390 = vsel %vm2382, %v2369, %v2372
  %v2391 = vsel %vm2385, %v2378, 920167782
  %v2392 = vsel %vm2384, %v2375, %v2391
  %v2393 = vsel %vm2383, %v2390, %v2392
  %v2394 = vsel %vm2382, %v2372, %v2375
  %v2395 = vsel %vm2385, %v2381, 1326507024
  %v2396 = vsel %vm2384, %v2378, %v2395
  %v2397 = vsel %vm2383, %v2394, %v2396
  %v2398 = vshll.u32 %v2358, 8
  %v2399 = vand.u32 %v2398, 65535
  %v2400 = vshrl.u32 %v2398, 16
  %v2401 = vand.u32 %v2397, 65535
  %v2402 = vshrl.u32 %v2397, 16
  %v2403 = vmul.u32 %v2399, %v2401
  %v2404 = vmul.u32 %v2399, %v2402
  %v2405 = vmul.u32 %v2400, %v2401
  %v2406 = vmul.u32 %v2400, %v2402
  %v2407 = vshll.u32 %v2404, 16
  %v2408 = vshrl.u32 %v2404, 16
  %v2409 = vshll.u32 %v2405, 16
  %v2410 = vshrl.u32 %v2405, 16
  %vm2411 = vc.u32 %v2403, %v2407
  %v2412 = vsel %vm2411, 1, 0
  %v2413 = vadd.s32 %v2403, %v2407
  %v2414 = vadd.s32 %v2406, %v2412
  %vm2415 = vc.u32 %v2413, %v2409
  %v2416 = vsel %vm2415, 1, 0
  %v2417 = vadd.s32 %v2413, %v2409
  %v2418 = vadd.s32 %v2414, %v2416
  %v2419 = vadd.s32 %v2418, %v2408
  %v2420 = vadd.s32 %v2419, %v2410
  %v2421 = vand.u32 %v2398, 65535
  %v2422 = vshrl.u32 %v2398, 16
  %v2423 = vand.u32 %v2393, 65535
  %v2424 = vshrl.u32 %v2393, 16
  %v2425 = vmul.u32 %v2421, %v2423
  %v2426 = vmul.u32 %v2421, %v2424
  %v2427 = vmul.u32 %v2422, %v2423
  %v2428 = vmul.u32 %v2422, %v2424
  %v2429 = vshll.u32 %v2426, 16
  %v2430 = vshrl.u32 %v2426, 16
  %v2431 = vshll.u32 %v2427, 16
  %v2432 = vshrl.u32 %v2427, 16
  %vm2433 = vc.u32 %v2425, %v2429
  %v2434 = vsel %vm2433, 1, 0
  %v2435 = vadd.s32 %v2425, %v2429
  %v2436 = vadd.s32 %v2428, %v2434
  %vm2437 = vc.u32 %v2435, %v2431
  %v2438 = vsel %vm2437, 1, 0
  %v2439 = vadd.s32 %v2435, %v2431
  %v2440 = vadd.s32 %v2436, %v2438
  %v2441 = vadd.s32 %v2440, %v2430
  %v2442 = vadd.s32 %v2441, %v2432
  %v2443 = vmul.u32 %v2398, %v2389
  %v2444 = vadd.s32 %v2420, %v2439
  %vm2445 = vc.u32 %v2420, %v2439
  %v2446 = vadd.s32 %v2442, 1
  %v2447 = vsel %vm2445, %v2446, %v2442
  %v2448 = vadd.s32 %v2443, %v2447
  %v2449 = vadd.s32 %v2448, 536870912
  %v2450 = vshrl.u32 %v2449, 30
  %v2451 = vshll.u32 %v2450, 30
  %v2452 = vsub.s32 %v2448, %v2451
  %vm2453 = vcmp.lt.s32.totalorder %v2452, 0
  %v2454 = vsub.s32 0, %v2452
  %v2455 = vsel %vm2453, %v2454, %v2452
  %v2456 = vclz %v2455
  %v2457 = vsub.s32 %v2456, 2
  %vm2458 = vcmp.gt.s32.totalorder 0, %v2457
  %v2459 = vsel %vm2458, 0, %v2457
  %v2460 = vsub.s32 32, %v2459
  %v2461 = vshll.u32 %v2452, %v2459
  %v2462 = vshrl.u32 %v2444, %v2460
  %v2463 = vor.u32 %v2461, %v2462
  %v2464 = vsub.s32 4294967266, %v2459
  %v2465 = vadd.s32 %v2464, 127
  %v2466 = vshll.u32 %v2465, 23
  %v2467 = vor.u32 4788187, %v2466
  %v2468 = vand.u32 2147483647, %v2467
  %v2470 = vcvt.s32.f32 %v2463
  %v2471 = vmul.f32 %v2470, %v2468
  %v2472 = vxor.u32 %v2471, 2147483648
  %v2473 = vsel %vm2352, %v2472, %v2471
  %v2474 = vsub.s32 4, %v2450
  %v2475 = vsel %vm2352, %v2474, %v2450
  %v2476 = vsel %vm2351, %v39, %v2473
  %v2477 = vsel %vm2351, 0, %v2475
  %v2478 = vmul.f32 %v2476, %v2476
  %v2479 = vmul.f32 %v2478, -0.001358992
  %v2480 = vadd.f32 %v2479, 0.041655596
  %v2481 = vmul.f32 %v2478, %v2480
  %v2482 = vadd.f32 %v2481, -0.4999988
  %v2483 = vmul.f32 %v2478, %v2482
  %v2484 = vadd.f32 1.0, %v2483
  %v2485 = vmul.f32 %v2476, %v2476
  %v2486 = vmul.f32 %v2485, -0.00019511016
  %v2487 = vadd.f32 %v2486, 0.008332121
  %v2488 = vmul.f32 %v2485, %v2487
  %v2489 = vadd.f32 %v2488, -0.16666654
  %v2490 = vmul.f32 %v2485, %v2489
  %v2491 = vadd.f32 %v2490, 1.0
  %v2492 = vmul.f32 %v2491, %v2476
  %vm2493 = vweird.f32 %v39
  %v2494 = vand.u32 %v2477, 3
  %vm2495 = vcmp.lt.s32.totalorder %v2494, 2
  %vm2496 = vcmp.eq.s32.totalorder %v2494, 0
  %v2497 = vxor.u32 %v2492, 2147483648
  %v2498 = vsel %vm2496, %v2484, %v2497
  %vm2499 = vcmp.eq.s32.totalorder %v2494, 2
  %v2500 = vxor.u32 %v2484, 2147483648
  %v2501 = vsel %vm2499, %v2500, %v2492
  %v2502 = vsel %vm2495, %v2498, %v2501
  %v2503 = vsel %vm2493, nan, %v2502
  %v2504 = vmul.f32 %v193, %v193
  %v2505 = vmul.f32 %v347, %v347
  %v2506 = vmul.f32 %v501, %v501
  %v2507 = vmul.f32 %v655, %v655
  %v2508 = vmul.f32 %v809, %v809
  %v2509 = vmul.f32 %v963, %v963
  %v2510 = vmul.f32 %v1117, %v1117
  %v2511 = vmul.f32 %v1271, %v1271
  %v2512 = vmul.f32 %v1425, %v1425
  %v2513 = vmul.f32 %v1579, %v1579
  %v2514 = vmul.f32 %v1733, %v1733
  %v2515 = vmul.f32 %v1887, %v1887
  %v2516 = vmul.f32 %v2041, %v2041
  %v2517 = vmul.f32 %v2195, %v2195
  %v2518 = vmul.f32 %v2349, %v2349
  %v2519 = vmul.f32 %v2503, %v2503
  %vm2520 = vcmp.lt.f32.partialorder %v8, 5.0
  %vm2521 = vcmp.lt.f32.partialorder %v9, 5.0
  %vm2522 = vcmp.lt.f32.partialorder %v10, 5.0
  %vm2523 = vcmp.lt.f32.partialorder %v11, 5.0
  %vm2524 = vcmp.lt.f32.partialorder %v12, 5.0
  %vm2525 = vcmp.lt.f32.partialorder %v13, 5.0
  %vm2526 = vcmp.lt.f32.partialorder %v14, 5.0
  %vm2527 = vcmp.lt.f32.partialorder %v15, 5.0
  %vm2528 = vcmp.lt.f32.partialorder %v16, 5.0
  %vm2529 = vcmp.lt.f32.partialorder %v17, 5.0
  %vm2530 = vcmp.lt.f32.partialorder %v18, 5.0
  %vm2531 = vcmp.lt.f32.partialorder %v19, 5.0
  %vm2532 = vcmp.lt.f32.partialorder %v20, 5.0
  %vm2533 = vcmp.lt.f32.partialorder %v21, 5.0
  %vm2534 = vcmp.lt.f32.partialorder %v22, 5.0
  %vm2535 = vcmp.lt.f32.partialorder %v23, 5.0
  %v2536 = vsel %vm2520, %v2504, 0.0
  %v2537 = vsel %vm2521, %v2505, 0.0
  %v2538 = vsel %vm2522, %v2506, 0.0
  %v2539 = vsel %vm2523, %v2507, 0.0
  %v2540 = vsel %vm2524, %v2508, 0.0
  %v2541 = vsel %vm2525, %v2509, 0.0
  %v2542 = vsel %vm2526, %v2510, 0.0
  %v2543 = vsel %vm2527, %v2511, 0.0
  %v2544 = vsel %vm2528, %v2512, 0.0
  %v2545 = vsel %vm2529, %v2513, 0.0
  %v2546 = vsel %vm2530, %v2514, 0.0
  %v2547 = vsel %vm2531, %v2515, 0.0
  %v2548 = vsel %vm2532, %v2516, 0.0
  %v2549 = vsel %vm2533, %v2517, 0.0
  %v2550 = vsel %vm2534, %v2518, 0.0
  %v2551 = vsel %vm2535, %v2519, 0.0
  %2552 = vst [vmem:[%s1] sm:$0xff] %v2536
  %2553 = vst [vmem:[%s1 + $0x8] sm:$0xff] %v2537
  %2554 = vst [vmem:[%s1 + $0x10] sm:$0xff] %v2538
  %2555 = vst [vmem:[%s1 + $0x18] sm:$0xff] %v2539
  %2556 = vst [vmem:[%s1 + $0x20] sm:$0xff] %v2540
  %2557 = vst [vmem:[%s1 + $0x28] sm:$0xff] %v2541
  %2558 = vst [vmem:[%s1 + $0x30] sm:$0xff] %v2542
  %2559 = vst [vmem:[%s1 + $0x38] sm:$0xff] %v2543
  %2560 = vst [vmem:[%s1 + $0x40] sm:$0xff] %v2544
  %2561 = vst [vmem:[%s1 + $0x48] sm:$0xff] %v2545
  %2562 = vst [vmem:[%s1 + $0x50] sm:$0xff] %v2546
  %2563 = vst [vmem:[%s1 + $0x58] sm:$0xff] %v2547
  %2564 = vst [vmem:[%s1 + $0x60] sm:$0xff] %v2548
  %2565 = vst [vmem:[%s1 + $0x68] sm:$0xff] %v2549
  %2566 = vst [vmem:[%s1 + $0x70] sm:$0xff] %v2550
  %2567 = vst [vmem:[%s1 + $0x78] sm:$0xff] %v2551
  // Predicated region
  $region6: #{cosine_cutoff.1} parent=0 // pred_check
    _
  $region7: #{cosine_cutoff.1} parent=0 // pred_check_branch
    %2569 = sbr.rel (0) target = $region9
  $region8: #{cosine_cutoff.1} parent=0 // pred_region
    _
  $region9: #{cosine_cutoff.1} parent=0 // pred_fallthru
    _
  // Predicated region
  $region10: #{cosine_cutoff.1} parent=0 // pred_check
    _
  $region11: #{cosine_cutoff.1} parent=0 // pred_check_branch
    %2571 = sbr.rel (0) target = $region13
  $region12: #{cosine_cutoff.1} parent=0 // pred_region
    _
  $region13: #{cosine_cutoff.1} parent=0 // pred_fallthru
    _

</llo_original>
